<compile_context>
chip_gen: v5e
topology: v5e:2x2
jax: 0.10.0
libtpu: 0.0.40
codegen_flags: <defaults>
</compile_context>

<pallas_src>
import functools
import math

import jax
import jax.numpy as jnp
from jax import lax
from jax.experimental import pallas as pl
from jax.experimental.pallas import tpu as pltpu

# Matmul operand dtype. Kept f32 for numerical parity with the PyTorch f32
# reference; set to jnp.bfloat16 on v6e/v7x for full-rate MXU + halved weight
# VMEM/HBM traffic (accumulation stays f32 via preferred_element_type).
_MXU_DTYPE = jnp.float32


def _pick_tile(dim, target, align):
    """Largest tile <= target that is the full dim or an `align`-multiple divisor."""
    if dim <= target:
        return dim
    t = (min(target, dim) // align) * align
    while t >= align:
        if dim % t == 0:
            return t
        t -= align
    return dim


def _pick_chunk(T, target):
    c = min(T, target)
    while T % c:
        c -= 1
    return c


# -----------------------------------------------------------------------------
# Shared tiled linear kernel:  out = x @ W + b   (used for both the hoisted
# input projection and the vocabulary projection).
# -----------------------------------------------------------------------------
def _linear_kernel(x_ref, w_ref, b_ref, o_ref):
    o_ref[...] = (
        jnp.dot(x_ref[...].astype(_MXU_DTYPE),
                w_ref[...].astype(_MXU_DTYPE),
                preferred_element_type=jnp.float32)
        + b_ref[...])


def linear_forward(x2d, w, b, *, tm_target=256, tn_target=512):
    M, K = x2d.shape
    N = w.shape[-1]
    tm = _pick_tile(M, tm_target, 8)
    tn = _pick_tile(N, tn_target, 128)
    grid = (M // tm, N // tn)
    return pl.pallas_call(
        _linear_kernel,
        grid_spec=pltpu.PrefetchScalarGridSpec(
            num_scalar_prefetch=0,
            grid=grid,
            in_specs=[
                pl.BlockSpec((tm, K), lambda i, j: (i, 0)),   # x tile (K resident)
                pl.BlockSpec((K, tn), lambda i, j: (0, j)),   # W tile
                pl.BlockSpec((1, tn), lambda i, j: (0, j)),   # bias tile
            ],
            out_specs=pl.BlockSpec((tm, tn), lambda i, j: (i, j)),
        ),
        out_shape=jax.ShapeDtypeStruct((M, N), jnp.float32),
        compiler_params=pltpu.CompilerParams(
            dimension_semantics=("parallel", "parallel")),
    )(x2d, w, b.reshape(1, N))


# -----------------------------------------------------------------------------
# LSTM recurrence: one grid step == one chunk of `chunk` time steps.
# gates_x already holds x_t @ W_ih + (b_ih + b_hh), so the serial loop only
# does h_prev @ W_hh plus elementwise gate math. (h, c) carry lives in VMEM
# scratch; hT/cT are written once at the end.
# -----------------------------------------------------------------------------
def _lstm_chunk_kernel(gx_ref, whh_ref, len_ref, h0_ref, c0_ref,
                       hs_ref, hT_ref, cT_ref, h_sc, c_sc, *, hidden, chunk):
    ci = pl.program_id(0)

    @pl.when(ci == 0)
    def _():
        h_sc[...] = h0_ref[...]
        c_sc[...] = c0_ref[...]

    w_hh = whh_ref[...].astype(_MXU_DTYPE)   # hoisted: loaded once per chunk
    lengths = len_ref[...]                   # (B, 1) int32
    H = hidden

    def step(s, carry):
        t = ci * chunk + s
        h_prev = h_sc[...]
        c_prev = c_sc[...]
        gates = gx_ref[s] + jnp.dot(h_prev.astype(_MXU_DTYPE), w_hh,
                                    preferred_element_type=jnp.float32)
        i = jax.nn.sigmoid(gates[:, 0 * H:1 * H])
        f = jax.nn.sigmoid(gates[:, 1 * H:2 * H])
        g = jnp.tanh(gates[:, 2 * H:3 * H])
        o = jax.nn.sigmoid(gates[:, 3 * H:4 * H])
        c_new = f * c_prev + i * g
        h_new = o * jnp.tanh(c_new)
        valid = t < lengths                              # (B, 1) mask
        h_sc[...] = jnp.where(valid, h_new, h_prev)      # freeze carry past length
        c_sc[...] = jnp.where(valid, c_new, c_prev)
        hs_ref[s] = jnp.where(valid, h_new, 0.0)         # packed-seq padding -> 0
        return carry

    lax.fori_loop(0, chunk, step, 0, unroll=True)

    @pl.when(ci == pl.num_programs(0) - 1)
    def _():
        hT_ref[...] = h_sc[...]
        cT_ref[...] = c_sc[...]


def lstm_forward(gates_x, w_hh, lengths, h0, c0, *, chunk_target=16):
    """gates_x: (T, B, 4H) = x @ W_ih + bias.  Returns (hs, hT, cT)."""
    T, B, G = gates_x.shape
    H = h0.shape[-1]
    assert G == 4 * H

    # Pad batch to the sublane granule (8) so matmul / store tiles are aligned.
    Bp = max(8, -(-B // 8) * 8)
    if Bp != B:
        gates_x = jnp.pad(gates_x, ((0, 0), (0, Bp - B), (0, 0)))
        h0 = jnp.pad(h0, ((0, Bp - B), (0, 0)))
        c0 = jnp.pad(c0, ((0, Bp - B), (0, 0)))
        lengths = jnp.pad(lengths, (0, Bp - B))          # pad rows never update
    len_col = lengths.astype(jnp.int32).reshape(Bp, 1)

    chunk = _pick_chunk(T, chunk_target)
    grid = (T // chunk,)

    hs, hT, cT = pl.pallas_call(
        functools.partial(_lstm_chunk_kernel, hidden=H, chunk=chunk),
        grid_spec=pltpu.PrefetchScalarGridSpec(
            num_scalar_prefetch=0,
            grid=grid,
            in_specs=[
                pl.BlockSpec((chunk, Bp, 4 * H), lambda c: (c, 0, 0)),  # gates_x chunk
                pl.BlockSpec((H, 4 * H), lambda c: (0, 0)),             # W_hh^T (resident)
                pl.BlockSpec((Bp, 1), lambda c: (0, 0)),                # lengths
                pl.BlockSpec((Bp, H), lambda c: (0, 0)),                # h0
                pl.BlockSpec((Bp, H), lambda c: (0, 0)),                # c0
            ],
            out_specs=[
                pl.BlockSpec((chunk, Bp, H), lambda c: (c, 0, 0)),      # hidden states
                pl.BlockSpec((Bp, H), lambda c: (0, 0)),                # final hidden
                pl.BlockSpec((Bp, H), lambda c: (0, 0)),                # final cell
            ],
            scratch_shapes=[
                pltpu.VMEM((Bp, H), jnp.float32),                       # h carry
                pltpu.VMEM((Bp, H), jnp.float32),                       # c carry
            ],
        ),
        out_shape=(
            jax.ShapeDtypeStruct((T, Bp, H), jnp.float32),
            jax.ShapeDtypeStruct((Bp, H), jnp.float32),
            jax.ShapeDtypeStruct((Bp, H), jnp.float32),
        ),
        compiler_params=pltpu.CompilerParams(
            dimension_semantics=("arbitrary",)),  # recurrence is inherently serial
    )(gates_x, w_hh, len_col, h0, c0)

    return hs[:, :B, :], hT[:B], cT[:B]


# -----------------------------------------------------------------------------
# Decoder forward (Embedding -> LSTM -> Linear)
# -----------------------------------------------------------------------------
def decoder_forward(params, tgt_tokens, tgt_lengths, initial_hidden, initial_cell):
    T, B = tgt_tokens.shape
    E = params["w_ih"].shape[0]
    H = params["w_hh"].shape[0]
    V = params["proj_w"].shape[-1]

    # 1) Embedding lookup (glue / gather in plain JAX).
    x_emb = params["embedding"][tgt_tokens]                      # (T, B, E)

    # 2) Input projection hoisted off the serial critical path: one big tiled
    #    MXU matmul over all T*B rows (includes the combined LSTM bias).
    gates_x = linear_forward(x_emb.reshape(T * B, E),
                             params["w_ih"], params["bias"])     # (T*B, 4H)
    gates_x = gates_x.reshape(T, B, 4 * H)

    # 3) Recurrence (chunked grid, length-masked).
    h0 = initial_hidden.reshape(B, H)
    c0 = initial_cell.reshape(B, H)
    hs, hT, cT = lstm_forward(gates_x, params["w_hh"], tgt_lengths, h0, c0)

    # 4) Output projection, tiled (parallel x parallel grid).
    logits = linear_forward(hs.reshape(T * B, H),
                            params["proj_w"], params["proj_b"])  # (T*B, V)
    logits = logits.reshape(T, B, V)

    return logits, hT.reshape(1, B, H), cT.reshape(1, B, H)


# -----------------------------------------------------------------------------
# Deterministic parameter init (PyTorch-style uniform(-1/sqrt(H), 1/sqrt(H)))
# -----------------------------------------------------------------------------
def init_params(key, vocab_size, embed_dim, hidden):
    k = jax.random.split(key, 7)
    bound = 1.0 / math.sqrt(hidden)
    u = lambda kk, shape: jax.random.uniform(kk, shape, jnp.float32, -bound, bound)
    return {
        "embedding": jax.random.normal(k[0], (vocab_size, embed_dim), jnp.float32),
        # Stored transposed so kernels do x @ W directly.
        "w_ih": u(k[1], (embed_dim, 4 * hidden)),
        "w_hh": u(k[2], (hidden, 4 * hidden)),
        "bias": u(k[3], (4 * hidden,)),          # b_ih + b_hh combined
        "proj_w": u(k[4], (hidden, vocab_size)),
        "proj_b": u(k[5], (vocab_size,)),
    }


if __name__ == "__main__":
    VOCAB = 16
    EMBED = 32
    HIDDEN = 32
    T, B = 8, 2

    params = init_params(jax.random.PRNGKey(42), VOCAB, EMBED, HIDDEN)

    key = jax.random.PRNGKey(0)
    k_tok, k_h, k_c = jax.random.split(key, 3)
    tgt_tokens = jax.random.randint(k_tok, (T, B), 0, VOCAB, dtype=jnp.int32)
    tgt_lengths = jnp.full((B,), T, dtype=jnp.int32)
    initial_hidden = jax.random.normal(k_h, (1, B, HIDDEN), jnp.float32)
    initial_cell = jax.random.normal(k_c, (1, B, HIDDEN), jnp.float32)

    logits, hidden, cell = jax.jit(decoder_forward)(
        params, tgt_tokens, tgt_lengths, initial_hidden, initial_cell)
    jax.block_until_ready((logits, hidden, cell))

    assert logits.shape == (T, B, VOCAB)
    assert hidden.shape == (1, B, HIDDEN)
    assert cell.shape == (1, B, HIDDEN)
    print("KERNEL_OK")
</pallas_src>

<mosaic_0001>
module attributes {stable_mosaic.version = 11 : i64} {
  func.func @_linear_kernel(%arg0: i32, %arg1: i32, %arg2: memref<16x32xf32, #tpu.memory_space<vmem>>, %arg3: memref<32x128xf32, #tpu.memory_space<vmem>>, %arg4: memref<1x128xf32, #tpu.memory_space<vmem>>, %arg5: memref<16x128xf32, #tpu.memory_space<vmem>>) attributes {dimension_semantics = [#tpu.dimension_semantics<parallel>, #tpu.dimension_semantics<parallel>], iteration_bounds = array<i64: 1, 1>, scalar_prefetch = 0 : i64, scratch_operands = 0 : i64, tpu.core_type = #tpu.core_type<tc>, window_params = [{transform_indices = @transform_0, window_bounds = array<i64: 16, 32>}, {transform_indices = @transform_1, window_bounds = array<i64: 32, 128>}, {transform_indices = @transform_2, window_bounds = array<i64: 1, 128>}, {transform_indices = @transform_3, window_bounds = array<i64: 16, 128>}]} {
    %c0 = arith.constant 0 : index
    %c0_0 = arith.constant 0 : index
    %0 = vector.load %arg2[%c0, %c0_0] : memref<16x32xf32, #tpu.memory_space<vmem>>, vector<16x32xf32>
    %c0_1 = arith.constant 0 : index
    %c0_2 = arith.constant 0 : index
    %1 = vector.load %arg3[%c0_1, %c0_2] : memref<32x128xf32, #tpu.memory_space<vmem>>, vector<32x128xf32>
    %cst = arith.constant dense<0.000000e+00> : vector<16x128xf32>
    %2 = tpu.matmul %0, %1, %cst {dimension_numbers = #tpu.dot_dimension_numbers<[1], [0], [0], [1], [0, 0, 1, 1], [], []>} : vector<16x32xf32>, vector<32x128xf32>, vector<16x128xf32> -> vector<16x128xf32>
    %c0_3 = arith.constant 0 : index
    %c0_4 = arith.constant 0 : index
    %3 = vector.load %arg4[%c0_3, %c0_4] : memref<1x128xf32, #tpu.memory_space<vmem>>, vector<1x128xf32>
    %4 = vector.broadcast %3 : vector<1x128xf32> to vector<16x128xf32>
    %5 = arith.addf %2, %4 : vector<16x128xf32>
    %c0_5 = arith.constant 0 : index
    %c0_6 = arith.constant 0 : index
    %6 = vector.load %arg5[%c0_5, %c0_6] : memref<16x128xf32, #tpu.memory_space<vmem>>, vector<16x128xf32>
    tpu.vector_store %arg5[%c0_5, %c0_6], %5 {strides = array<i32>} : memref<16x128xf32, #tpu.memory_space<vmem>>, vector<16x128xf32>,
    return
  }
  func.func @transform_0(%arg0: i32, %arg1: i32) -> (i32, i32) {
    %c0_i32 = arith.constant 0 : i32
    %c0_i32_0 = arith.constant 0 : i32
    return %arg0, %c0_i32 : i32, i32
  }
  func.func @transform_1(%arg0: i32, %arg1: i32) -> (i32, i32) {
    %c0_i32 = arith.constant 0 : i32
    %c0_i32_0 = arith.constant 0 : i32
    return %c0_i32, %arg1 : i32, i32
  }
  func.func @transform_2(%arg0: i32, %arg1: i32) -> (i32, i32) {
    %c0_i32 = arith.constant 0 : i32
    %c0_i32_0 = arith.constant 0 : i32
    return %c0_i32, %arg1 : i32, i32
  }
  func.func @transform_3(%arg0: i32, %arg1: i32) -> (i32, i32) {
    %c0_i32 = arith.constant 0 : i32
    return %arg0, %arg1 : i32, i32
  }
}

module attributes {stable_mosaic.version = 11 : i64} {
  func.func @_linear_kernel(%arg0: i32, %arg1: i32, %arg2: memref<16x32xf32, #tpu.memory_space<vmem>>, %arg3: memref<32x16xf32, #tpu.memory_space<vmem>>, %arg4: memref<1x16xf32, #tpu.memory_space<vmem>>, %arg5: memref<16x16xf32, #tpu.memory_space<vmem>>) attributes {dimension_semantics = [#tpu.dimension_semantics<parallel>, #tpu.dimension_semantics<parallel>], iteration_bounds = array<i64: 1, 1>, scalar_prefetch = 0 : i64, scratch_operands = 0 : i64, tpu.core_type = #tpu.core_type<tc>, window_params = [{transform_indices = @transform_0, window_bounds = array<i64: 16, 32>}, {transform_indices = @transform_1, window_bounds = array<i64: 32, 16>}, {transform_indices = @transform_2, window_bounds = array<i64: 1, 16>}, {transform_indices = @transform_3, window_bounds = array<i64: 16, 16>}]} {
    %c0 = arith.constant 0 : index
    %c0_0 = arith.constant 0 : index
    %0 = vector.load %arg2[%c0, %c0_0] : memref<16x32xf32, #tpu.memory_space<vmem>>, vector<16x32xf32>
    %c0_1 = arith.constant 0 : index
    %c0_2 = arith.constant 0 : index
    %1 = vector.load %arg3[%c0_1, %c0_2] : memref<32x16xf32, #tpu.memory_space<vmem>>, vector<32x16xf32>
    %cst = arith.constant dense<0.000000e+00> : vector<16x16xf32>
    %2 = tpu.matmul %0, %1, %cst {dimension_numbers = #tpu.dot_dimension_numbers<[1], [0], [0], [1], [0, 0, 1, 1], [], []>} : vector<16x32xf32>, vector<32x16xf32>, vector<16x16xf32> -> vector<16x16xf32>
    %c0_3 = arith.constant 0 : index
    %c0_4 = arith.constant 0 : index
    %3 = vector.load %arg4[%c0_3, %c0_4] : memref<1x16xf32, #tpu.memory_space<vmem>>, vector<1x16xf32>
    %4 = vector.broadcast %3 : vector<1x16xf32> to vector<16x16xf32>
    %5 = arith.addf %2, %4 : vector<16x16xf32>
    %c0_5 = arith.constant 0 : index
    %c0_6 = arith.constant 0 : index
    %6 = vector.load %arg5[%c0_5, %c0_6] : memref<16x16xf32, #tpu.memory_space<vmem>>, vector<16x16xf32>
    tpu.vector_store %arg5[%c0_5, %c0_6], %5 {strides = array<i32>} : memref<16x16xf32, #tpu.memory_space<vmem>>, vector<16x16xf32>,
    return
  }
  func.func @transform_0(%arg0: i32, %arg1: i32) -> (i32, i32) {
    %c0_i32 = arith.constant 0 : i32
    %c0_i32_0 = arith.constant 0 : i32
    return %arg0, %c0_i32 : i32, i32
  }
  func.func @transform_1(%arg0: i32, %arg1: i32) -> (i32, i32) {
    %c0_i32 = arith.constant 0 : i32
    %c0_i32_0 = arith.constant 0 : i32
    return %c0_i32, %arg1 : i32, i32
  }
  func.func @transform_2(%arg0: i32, %arg1: i32) -> (i32, i32) {
    %c0_i32 = arith.constant 0 : i32
    %c0_i32_0 = arith.constant 0 : i32
    return %c0_i32, %arg1 : i32, i32
  }
  func.func @transform_3(%arg0: i32, %arg1: i32) -> (i32, i32) {
    %c0_i32 = arith.constant 0 : i32
    return %arg0, %arg1 : i32, i32
  }
}

module attributes {stable_mosaic.version = 11 : i64} {
  func.func @_lstm_chunk_kernel(%arg0: i32, %arg1: memref<8x8x128xf32, #tpu.memory_space<vmem>>, %arg2: memref<32x128xf32, #tpu.memory_space<vmem>>, %arg3: memref<8x1xi32, #tpu.memory_space<vmem>>, %arg4: memref<8x32xf32, #tpu.memory_space<vmem>>, %arg5: memref<8x32xf32, #tpu.memory_space<vmem>>, %arg6: memref<8x8x32xf32, #tpu.memory_space<vmem>>, %arg7: memref<8x32xf32, #tpu.memory_space<vmem>>, %arg8: memref<8x32xf32, #tpu.memory_space<vmem>>, %arg9: memref<8x32xf32, #tpu.memory_space<vmem>>, %arg10: memref<8x32xf32, #tpu.memory_space<vmem>>) attributes {dimension_semantics = [#tpu.dimension_semantics<arbitrary>], iteration_bounds = array<i64: 1>, scalar_prefetch = 0 : i64, scratch_operands = 2 : i64, tpu.core_type = #tpu.core_type<tc>, window_params = [{transform_indices = @transform_0, window_bounds = array<i64: 8, 8, 128>}, {pipeline_mode = #tpu.pipeline_mode<synchronous>, transform_indices = @transform_1, window_bounds = array<i64: 32, 128>}, {pipeline_mode = #tpu.pipeline_mode<synchronous>, transform_indices = @transform_2, window_bounds = array<i64: 8, 1>}, {pipeline_mode = #tpu.pipeline_mode<synchronous>, transform_indices = @transform_3, window_bounds = array<i64: 8, 32>}, {pipeline_mode = #tpu.pipeline_mode<synchronous>, transform_indices = @transform_4, window_bounds = array<i64: 8, 32>}, {transform_indices = @transform_5, window_bounds = array<i64: 8, 8, 32>}, {pipeline_mode = #tpu.pipeline_mode<synchronous>, transform_indices = @transform_6, window_bounds = array<i64: 8, 32>}, {pipeline_mode = #tpu.pipeline_mode<synchronous>, transform_indices = @transform_7, window_bounds = array<i64: 8, 32>}]} {
    %c0_i32 = arith.constant 0 : i32
    %0 = arith.cmpi eq, %arg0, %c0_i32 : i32
    %1 = arith.extui %0 : i1 to i32
    %c0_i32_0 = arith.constant 0 : i32
    %2 = arith.cmpi ne, %1, %c0_i32_0 : i32
    scf.if %2 {
      %c0_150 = arith.constant 0 : index
      %c0_151 = arith.constant 0 : index
      %424 = vector.load %arg4[%c0_150, %c0_151] : memref<8x32xf32, #tpu.memory_space<vmem>>, vector<8x32xf32>
      %c0_152 = arith.constant 0 : index
      %c0_153 = arith.constant 0 : index
      %425 = vector.load %arg9[%c0_152, %c0_153] : memref<8x32xf32, #tpu.memory_space<vmem>>, vector<8x32xf32>
      tpu.vector_store %arg9[%c0_152, %c0_153], %424 {strides = array<i32>} : memref<8x32xf32, #tpu.memory_space<vmem>>, vector<8x32xf32>,
      %c0_154 = arith.constant 0 : index
      %c0_155 = arith.constant 0 : index
      %426 = vector.load %arg5[%c0_154, %c0_155] : memref<8x32xf32, #tpu.memory_space<vmem>>, vector<8x32xf32>
      %c0_156 = arith.constant 0 : index
      %c0_157 = arith.constant 0 : index
      %427 = vector.load %arg10[%c0_156, %c0_157] : memref<8x32xf32, #tpu.memory_space<vmem>>, vector<8x32xf32>
      tpu.vector_store %arg10[%c0_156, %c0_157], %426 {strides = array<i32>} : memref<8x32xf32, #tpu.memory_space<vmem>>, vector<8x32xf32>,
    } else {
    }
    %c0 = arith.constant 0 : index
    %c0_1 = arith.constant 0 : index
    %3 = vector.load %arg2[%c0, %c0_1] : memref<32x128xf32, #tpu.memory_space<vmem>>, vector<32x128xf32>
    %c0_2 = arith.constant 0 : index
    %c0_3 = arith.constant 0 : index
    %4 = vector.load %arg3[%c0_2, %c0_3] : memref<8x1xi32, #tpu.memory_space<vmem>>, vector<8x1xi32>
    %c0_i32_4 = arith.constant 0 : i32
    %c8_i32 = arith.constant 8 : i32
    %5 = arith.muli %arg0, %c8_i32 : i32
    %6 = arith.addi %5, %c0_i32_4 : i32
    %c0_5 = arith.constant 0 : index
    %c0_6 = arith.constant 0 : index
    %7 = vector.load %arg9[%c0_5, %c0_6] : memref<8x32xf32, #tpu.memory_space<vmem>>, vector<8x32xf32>
    %c0_7 = arith.constant 0 : index
    %c0_8 = arith.constant 0 : index
    %8 = vector.load %arg10[%c0_7, %c0_8] : memref<8x32xf32, #tpu.memory_space<vmem>>, vector<8x32xf32>
    %9 = arith.index_cast %c0_i32_4 : i32 to index
    %c0_9 = arith.constant 0 : index
    %c0_10 = arith.constant 0 : index
    %10 = vector.load %arg1[%9, %c0_9, %c0_10] : memref<8x8x128xf32, #tpu.memory_space<vmem>>, vector<1x8x128xf32>
    %11 = vector.shape_cast %10 : vector<1x8x128xf32> to vector<8x128xf32>
    %cst = arith.constant dense<0.000000e+00> : vector<8x128xf32>
    %12 = tpu.matmul %7, %3, %cst {dimension_numbers = #tpu.dot_dimension_numbers<[1], [0], [0], [1], [0, 0, 1, 1], [], []>} : vector<8x32xf32>, vector<32x128xf32>, vector<8x128xf32> -> vector<8x128xf32>
    %13 = arith.addf %11, %12 : vector<8x128xf32>
    %14 = vector.extract_strided_slice %13 {offsets = [0, 0], sizes = [8, 32], strides = [1, 1]} : vector<8x128xf32> to vector<8x32xf32>
    %15 = arith.negf %14 : vector<8x32xf32>
    %16 = math.exp %15 : vector<8x32xf32>
    %cst_11 = arith.constant 1.000000e+00 : f32
    %17 = vector.broadcast %cst_11 : f32 to vector<8x32xf32>
    %18 = arith.addf %17, %16 : vector<8x32xf32>
    %19 = arith.divf %17, %18 : vector<8x32xf32>
    %20 = vector.extract_strided_slice %13 {offsets = [0, 32], sizes = [8, 32], strides = [1, 1]} : vector<8x128xf32> to vector<8x32xf32>
    %21 = arith.negf %20 : vector<8x32xf32>
    %22 = math.exp %21 : vector<8x32xf32>
    %cst_12 = arith.constant 1.000000e+00 : f32
    %23 = vector.broadcast %cst_12 : f32 to vector<8x32xf32>
    %24 = arith.addf %23, %22 : vector<8x32xf32>
    %25 = arith.divf %23, %24 : vector<8x32xf32>
    %26 = vector.extract_strided_slice %13 {offsets = [0, 64], sizes = [8, 32], strides = [1, 1]} : vector<8x128xf32> to vector<8x32xf32>
    %27 = math.tanh %26 : vector<8x32xf32>
    %28 = vector.extract_strided_slice %13 {offsets = [0, 96], sizes = [8, 32], strides = [1, 1]} : vector<8x128xf32> to vector<8x32xf32>
    %29 = arith.negf %28 : vector<8x32xf32>
    %30 = math.exp %29 : vector<8x32xf32>
    %cst_13 = arith.constant 1.000000e+00 : f32
    %31 = vector.broadcast %cst_13 : f32 to vector<8x32xf32>
    %32 = arith.addf %31, %30 : vector<8x32xf32>
    %33 = arith.divf %31, %32 : vector<8x32xf32>
    %34 = arith.mulf %25, %8 : vector<8x32xf32>
    %35 = arith.mulf %19, %27 : vector<8x32xf32>
    %36 = arith.addf %34, %35 : vector<8x32xf32>
    %37 = math.tanh %36 : vector<8x32xf32>
    %38 = arith.mulf %33, %37 : vector<8x32xf32>
    %39 = vector.broadcast %6 : i32 to vector<8x1xi32>
    %40 = arith.cmpi slt, %39, %4 : vector<8x1xi32>
    %41 = vector.shape_cast %40 : vector<8x1xi1> to vector<8x1xi1>
    %42 = vector.broadcast %41 : vector<8x1xi1> to vector<8x32xi1>
    %43 = arith.select %42, %38, %7 : vector<8x32xi1>, vector<8x32xf32>
    %c0_14 = arith.constant 0 : index
    %c0_15 = arith.constant 0 : index
    %44 = vector.load %arg9[%c0_14, %c0_15] : memref<8x32xf32, #tpu.memory_space<vmem>>, vector<8x32xf32>
    tpu.vector_store %arg9[%c0_14, %c0_15], %43 {strides = array<i32>} : memref<8x32xf32, #tpu.memory_space<vmem>>, vector<8x32xf32>,
    %45 = vector.shape_cast %40 : vector<8x1xi1> to vector<8x1xi1>
    %46 = vector.broadcast %45 : vector<8x1xi1> to vector<8x32xi1>
    %47 = arith.select %46, %36, %8 : vector<8x32xi1>, vector<8x32xf32>
    %c0_16 = arith.constant 0 : index
    %c0_17 = arith.constant 0 : index
    %48 = vector.load %arg10[%c0_16, %c0_17] : memref<8x32xf32, #tpu.memory_space<vmem>>, vector<8x32xf32>
    tpu.vector_store %arg10[%c0_16, %c0_17], %47 {strides = array<i32>} : memref<8x32xf32, #tpu.memory_space<vmem>>, vector<8x32xf32>,
    %cst_18 = arith.constant 0.000000e+00 : f32
    %49 = vector.shape_cast %40 : vector<8x1xi1> to vector<8x1xi1>
    %50 = vector.broadcast %49 : vector<8x1xi1> to vector<8x32xi1>
    %51 = vector.broadcast %cst_18 : f32 to vector<8x32xf32>
    %52 = arith.select %50, %38, %51 : vector<8x32xi1>, vector<8x32xf32>
    %53 = arith.index_cast %c0_i32_4 : i32 to index
    %c0_19 = arith.constant 0 : index
    %c0_20 = arith.constant 0 : index
    %54 = vector.load %arg6[%53, %c0_19, %c0_20] : memref<8x8x32xf32, #tpu.memory_space<vmem>>, vector<1x8x32xf32>
    %55 = vector.shape_cast %54 : vector<1x8x32xf32> to vector<8x32xf32>
    %56 = vector.shape_cast %52 : vector<8x32xf32> to vector<1x8x32xf32>
    tpu.vector_store %arg6[%53, %c0_19, %c0_20], %56 {strides = array<i32>} : memref<8x8x32xf32, #tpu.memory_space<vmem>>, vector<1x8x32xf32>,
    %c1_i32 = arith.constant 1 : i32
    %c8_i32_21 = arith.constant 8 : i32
    %57 = arith.muli %arg0, %c8_i32_21 : i32
    %58 = arith.addi %57, %c1_i32 : i32
    %c0_22 = arith.constant 0 : index
    %c0_23 = arith.constant 0 : index
    %59 = vector.load %arg9[%c0_22, %c0_23] : memref<8x32xf32, #tpu.memory_space<vmem>>, vector<8x32xf32>
    %c0_24 = arith.constant 0 : index
    %c0_25 = arith.constant 0 : index
    %60 = vector.load %arg10[%c0_24, %c0_25] : memref<8x32xf32, #tpu.memory_space<vmem>>, vector<8x32xf32>
    %61 = arith.index_cast %c1_i32 : i32 to index
    %c0_26 = arith.constant 0 : index
    %c0_27 = arith.constant 0 : index
    %62 = vector.load %arg1[%61, %c0_26, %c0_27] : memref<8x8x128xf32, #tpu.memory_space<vmem>>, vector<1x8x128xf32>
    %63 = vector.shape_cast %62 : vector<1x8x128xf32> to vector<8x128xf32>
    %cst_28 = arith.constant dense<0.000000e+00> : vector<8x128xf32>
    %64 = tpu.matmul %59, %3, %cst_28 {dimension_numbers = #tpu.dot_dimension_numbers<[1], [0], [0], [1], [0, 0, 1, 1], [], []>} : vector<8x32xf32>, vector<32x128xf32>, vector<8x128xf32> -> vector<8x128xf32>
    %65 = arith.addf %63, %64 : vector<8x128xf32>
    %66 = vector.extract_strided_slice %65 {offsets = [0, 0], sizes = [8, 32], strides = [1, 1]} : vector<8x128xf32> to vector<8x32xf32>
    %67 = arith.negf %66 : vector<8x32xf32>
    %68 = math.exp %67 : vector<8x32xf32>
    %cst_29 = arith.constant 1.000000e+00 : f32
    %69 = vector.broadcast %cst_29 : f32 to vector<8x32xf32>
    %70 = arith.addf %69, %68 : vector<8x32xf32>
    %71 = arith.divf %69, %70 : vector<8x32xf32>
    %72 = vector.extract_strided_slice %65 {offsets = [0, 32], sizes = [8, 32], strides = [1, 1]} : vector<8x128xf32> to vector<8x32xf32>
    %73 = arith.negf %72 : vector<8x32xf32>
    %74 = math.exp %73 : vector<8x32xf32>
    %cst_30 = arith.constant 1.000000e+00 : f32
    %75 = vector.broadcast %cst_30 : f32 to vector<8x32xf32>
    %76 = arith.addf %75, %74 : vector<8x32xf32>
    %77 = arith.divf %75, %76 : vector<8x32xf32>
    %78 = vector.extract_strided_slice %65 {offsets = [0, 64], sizes = [8, 32], strides = [1, 1]} : vector<8x128xf32> to vector<8x32xf32>
    %79 = math.tanh %78 : vector<8x32xf32>
    %80 = vector.extract_strided_slice %65 {offsets = [0, 96], sizes = [8, 32], strides = [1, 1]} : vector<8x128xf32> to vector<8x32xf32>
    %81 = arith.negf %80 : vector<8x32xf32>
    %82 = math.exp %81 : vector<8x32xf32>
    %cst_31 = arith.constant 1.000000e+00 : f32
    %83 = vector.broadcast %cst_31 : f32 to vector<8x32xf32>
    %84 = arith.addf %83, %82 : vector<8x32xf32>
    %85 = arith.divf %83, %84 : vector<8x32xf32>
    %86 = arith.mulf %77, %60 : vector<8x32xf32>
    %87 = arith.mulf %71, %79 : vector<8x32xf32>
    %88 = arith.addf %86, %87 : vector<8x32xf32>
    %89 = math.tanh %88 : vector<8x32xf32>
    %90 = arith.mulf %85, %89 : vector<8x32xf32>
    %91 = vector.broadcast %58 : i32 to vector<8x1xi32>
    %92 = arith.cmpi slt, %91, %4 : vector<8x1xi32>
    %93 = vector.shape_cast %92 : vector<8x1xi1> to vector<8x1xi1>
    %94 = vector.broadcast %93 : vector<8x1xi1> to vector<8x32xi1>
    %95 = arith.select %94, %90, %59 : vector<8x32xi1>, vector<8x32xf32>
    %c0_32 = arith.constant 0 : index
    %c0_33 = arith.constant 0 : index
    %96 = vector.load %arg9[%c0_32, %c0_33] : memref<8x32xf32, #tpu.memory_space<vmem>>, vector<8x32xf32>
    tpu.vector_store %arg9[%c0_32, %c0_33], %95 {strides = array<i32>} : memref<8x32xf32, #tpu.memory_space<vmem>>, vector<8x32xf32>,
    %97 = vector.shape_cast %92 : vector<8x1xi1> to vector<8x1xi1>
    %98 = vector.broadcast %97 : vector<8x1xi1> to vector<8x32xi1>
    %99 = arith.select %98, %88, %60 : vector<8x32xi1>, vector<8x32xf32>
    %c0_34 = arith.constant 0 : index
    %c0_35 = arith.constant 0 : index
    %100 = vector.load %arg10[%c0_34, %c0_35] : memref<8x32xf32, #tpu.memory_space<vmem>>, vector<8x32xf32>
    tpu.vector_store %arg10[%c0_34, %c0_35], %99 {strides = array<i32>} : memref<8x32xf32, #tpu.memory_space<vmem>>, vector<8x32xf32>,
    %cst_36 = arith.constant 0.000000e+00 : f32
    %101 = vector.shape_cast %92 : vector<8x1xi1> to vector<8x1xi1>
    %102 = vector.broadcast %101 : vector<8x1xi1> to vector<8x32xi1>
    %103 = vector.broadcast %cst_36 : f32 to vector<8x32xf32>
    %104 = arith.select %102, %90, %103 : vector<8x32xi1>, vector<8x32xf32>
    %105 = arith.index_cast %c1_i32 : i32 to index
    %c0_37 = arith.constant 0 : index
    %c0_38 = arith.constant 0 : index
    %106 = vector.load %arg6[%105, %c0_37, %c0_38] : memref<8x8x32xf32, #tpu.memory_space<vmem>>, vector<1x8x32xf32>
    %107 = vector.shape_cast %106 : vector<1x8x32xf32> to vector<8x32xf32>
    %108 = vector.shape_cast %104 : vector<8x32xf32> to vector<1x8x32xf32>
    tpu.vector_store %arg6[%105, %c0_37, %c0_38], %108 {strides = array<i32>} : memref<8x8x32xf32, #tpu.memory_space<vmem>>, vector<1x8x32xf32>,
    %c2_i32 = arith.constant 2 : i32
    %c8_i32_39 = arith.constant 8 : i32
    %109 = arith.muli %arg0, %c8_i32_39 : i32
    %110 = arith.addi %109, %c2_i32 : i32
    %c0_40 = arith.constant 0 : index
    %c0_41 = arith.constant 0 : index
    %111 = vector.load %arg9[%c0_40, %c0_41] : memref<8x32xf32, #tpu.memory_space<vmem>>, vector<8x32xf32>
    %c0_42 = arith.constant 0 : index
    %c0_43 = arith.constant 0 : index
    %112 = vector.load %arg10[%c0_42, %c0_43] : memref<8x32xf32, #tpu.memory_space<vmem>>, vector<8x32xf32>
    %113 = arith.index_cast %c2_i32 : i32 to index
    %c0_44 = arith.constant 0 : index
    %c0_45 = arith.constant 0 : index
    %114 = vector.load %arg1[%113, %c0_44, %c0_45] : memref<8x8x128xf32, #tpu.memory_space<vmem>>, vector<1x8x128xf32>
    %115 = vector.shape_cast %114 : vector<1x8x128xf32> to vector<8x128xf32>
    %cst_46 = arith.constant dense<0.000000e+00> : vector<8x128xf32>
    %116 = tpu.matmul %111, %3, %cst_46 {dimension_numbers = #tpu.dot_dimension_numbers<[1], [0], [0], [1], [0, 0, 1, 1], [], []>} : vector<8x32xf32>, vector<32x128xf32>, vector<8x128xf32> -> vector<8x128xf32>
    %117 = arith.addf %115, %116 : vector<8x128xf32>
    %118 = vector.extract_strided_slice %117 {offsets = [0, 0], sizes = [8, 32], strides = [1, 1]} : vector<8x128xf32> to vector<8x32xf32>
    %119 = arith.negf %118 : vector<8x32xf32>
    %120 = math.exp %119 : vector<8x32xf32>
    %cst_47 = arith.constant 1.000000e+00 : f32
    %121 = vector.broadcast %cst_47 : f32 to vector<8x32xf32>
    %122 = arith.addf %121, %120 : vector<8x32xf32>
    %123 = arith.divf %121, %122 : vector<8x32xf32>
    %124 = vector.extract_strided_slice %117 {offsets = [0, 32], sizes = [8, 32], strides = [1, 1]} : vector<8x128xf32> to vector<8x32xf32>
    %125 = arith.negf %124 : vector<8x32xf32>
    %126 = math.exp %125 : vector<8x32xf32>
    %cst_48 = arith.constant 1.000000e+00 : f32
    %127 = vector.broadcast %cst_48 : f32 to vector<8x32xf32>
    %128 = arith.addf %127, %126 : vector<8x32xf32>
    %129 = arith.divf %127, %128 : vector<8x32xf32>
    %130 = vector.extract_strided_slice %117 {offsets = [0, 64], sizes = [8, 32], strides = [1, 1]} : vector<8x128xf32> to vector<8x32xf32>
    %131 = math.tanh %130 : vector<8x32xf32>
    %132 = vector.extract_strided_slice %117 {offsets = [0, 96], sizes = [8, 32], strides = [1, 1]} : vector<8x128xf32> to vector<8x32xf32>
    %133 = arith.negf %132 : vector<8x32xf32>
    %134 = math.exp %133 : vector<8x32xf32>
    %cst_49 = arith.constant 1.000000e+00 : f32
    %135 = vector.broadcast %cst_49 : f32 to vector<8x32xf32>
    %136 = arith.addf %135, %134 : vector<8x32xf32>
    %137 = arith.divf %135, %136 : vector<8x32xf32>
    %138 = arith.mulf %129, %112 : vector<8x32xf32>
    %139 = arith.mulf %123, %131 : vector<8x32xf32>
    %140 = arith.addf %138, %139 : vector<8x32xf32>
    %141 = math.tanh %140 : vector<8x32xf32>
    %142 = arith.mulf %137, %141 : vector<8x32xf32>
    %143 = vector.broadcast %110 : i32 to vector<8x1xi32>
    %144 = arith.cmpi slt, %143, %4 : vector<8x1xi32>
    %145 = vector.shape_cast %144 : vector<8x1xi1> to vector<8x1xi1>
    %146 = vector.broadcast %145 : vector<8x1xi1> to vector<8x32xi1>
    %147 = arith.select %146, %142, %111 : vector<8x32xi1>, vector<8x32xf32>
    %c0_50 = arith.constant 0 : index
    %c0_51 = arith.constant 0 : index
    %148 = vector.load %arg9[%c0_50, %c0_51] : memref<8x32xf32, #tpu.memory_space<vmem>>, vector<8x32xf32>
    tpu.vector_store %arg9[%c0_50, %c0_51], %147 {strides = array<i32>} : memref<8x32xf32, #tpu.memory_space<vmem>>, vector<8x32xf32>,
    %149 = vector.shape_cast %144 : vector<8x1xi1> to vector<8x1xi1>
    %150 = vector.broadcast %149 : vector<8x1xi1> to vector<8x32xi1>
    %151 = arith.select %150, %140, %112 : vector<8x32xi1>, vector<8x32xf32>
    %c0_52 = arith.constant 0 : index
    %c0_53 = arith.constant 0 : index
    %152 = vector.load %arg10[%c0_52, %c0_53] : memref<8x32xf32, #tpu.memory_space<vmem>>, vector<8x32xf32>
    tpu.vector_store %arg10[%c0_52, %c0_53], %151 {strides = array<i32>} : memref<8x32xf32, #tpu.memory_space<vmem>>, vector<8x32xf32>,
    %cst_54 = arith.constant 0.000000e+00 : f32
    %153 = vector.shape_cast %144 : vector<8x1xi1> to vector<8x1xi1>
    %154 = vector.broadcast %153 : vector<8x1xi1> to vector<8x32xi1>
    %155 = vector.broadcast %cst_54 : f32 to vector<8x32xf32>
    %156 = arith.select %154, %142, %155 : vector<8x32xi1>, vector<8x32xf32>
    %157 = arith.index_cast %c2_i32 : i32 to index
    %c0_55 = arith.constant 0 : index
    %c0_56 = arith.constant 0 : index
    %158 = vector.load %arg6[%157, %c0_55, %c0_56] : memref<8x8x32xf32, #tpu.memory_space<vmem>>, vector<1x8x32xf32>
    %159 = vector.shape_cast %158 : vector<1x8x32xf32> to vector<8x32xf32>
    %160 = vector.shape_cast %156 : vector<8x32xf32> to vector<1x8x32xf32>
    tpu.vector_store %arg6[%157, %c0_55, %c0_56], %160 {strides = array<i32>} : memref<8x8x32xf32, #tpu.memory_space<vmem>>, vector<1x8x32xf32>,
    %c3_i32 = arith.constant 3 : i32
    %c8_i32_57 = arith.constant 8 : i32
    %161 = arith.muli %arg0, %c8_i32_57 : i32
    %162 = arith.addi %161, %c3_i32 : i32
    %c0_58 = arith.constant 0 : index
    %c0_59 = arith.constant 0 : index
    %163 = vector.load %arg9[%c0_58, %c0_59] : memref<8x32xf32, #tpu.memory_space<vmem>>, vector<8x32xf32>
    %c0_60 = arith.constant 0 : index
    %c0_61 = arith.constant 0 : index
    %164 = vector.load %arg10[%c0_60, %c0_61] : memref<8x32xf32, #tpu.memory_space<vmem>>, vector<8x32xf32>
    %165 = arith.index_cast %c3_i32 : i32 to index
    %c0_62 = arith.constant 0 : index
    %c0_63 = arith.constant 0 : index
    %166 = vector.load %arg1[%165, %c0_62, %c0_63] : memref<8x8x128xf32, #tpu.memory_space<vmem>>, vector<1x8x128xf32>
    %167 = vector.shape_cast %166 : vector<1x8x128xf32> to vector<8x128xf32>
    %cst_64 = arith.constant dense<0.000000e+00> : vector<8x128xf32>
    %168 = tpu.matmul %163, %3, %cst_64 {dimension_numbers = #tpu.dot_dimension_numbers<[1], [0], [0], [1], [0, 0, 1, 1], [], []>} : vector<8x32xf32>, vector<32x128xf32>, vector<8x128xf32> -> vector<8x128xf32>
    %169 = arith.addf %167, %168 : vector<8x128xf32>
    %170 = vector.extract_strided_slice %169 {offsets = [0, 0], sizes = [8, 32], strides = [1, 1]} : vector<8x128xf32> to vector<8x32xf32>
    %171 = arith.negf %170 : vector<8x32xf32>
    %172 = math.exp %171 : vector<8x32xf32>
    %cst_65 = arith.constant 1.000000e+00 : f32
    %173 = vector.broadcast %cst_65 : f32 to vector<8x32xf32>
    %174 = arith.addf %173, %172 : vector<8x32xf32>
    %175 = arith.divf %173, %174 : vector<8x32xf32>
    %176 = vector.extract_strided_slice %169 {offsets = [0, 32], sizes = [8, 32], strides = [1, 1]} : vector<8x128xf32> to vector<8x32xf32>
    %177 = arith.negf %176 : vector<8x32xf32>
    %178 = math.exp %177 : vector<8x32xf32>
    %cst_66 = arith.constant 1.000000e+00 : f32
    %179 = vector.broadcast %cst_66 : f32 to vector<8x32xf32>
    %180 = arith.addf %179, %178 : vector<8x32xf32>
    %181 = arith.divf %179, %180 : vector<8x32xf32>
    %182 = vector.extract_strided_slice %169 {offsets = [0, 64], sizes = [8, 32], strides = [1, 1]} : vector<8x128xf32> to vector<8x32xf32>
    %183 = math.tanh %182 : vector<8x32xf32>
    %184 = vector.extract_strided_slice %169 {offsets = [0, 96], sizes = [8, 32], strides = [1, 1]} : vector<8x128xf32> to vector<8x32xf32>
    %185 = arith.negf %184 : vector<8x32xf32>
    %186 = math.exp %185 : vector<8x32xf32>
    %cst_67 = arith.constant 1.000000e+00 : f32
    %187 = vector.broadcast %cst_67 : f32 to vector<8x32xf32>
    %188 = arith.addf %187, %186 : vector<8x32xf32>
    %189 = arith.divf %187, %188 : vector<8x32xf32>
    %190 = arith.mulf %181, %164 : vector<8x32xf32>
    %191 = arith.mulf %175, %183 : vector<8x32xf32>
    %192 = arith.addf %190, %191 : vector<8x32xf32>
    %193 = math.tanh %192 : vector<8x32xf32>
    %194 = arith.mulf %189, %193 : vector<8x32xf32>
    %195 = vector.broadcast %162 : i32 to vector<8x1xi32>
    %196 = arith.cmpi slt, %195, %4 : vector<8x1xi32>
    %197 = vector.shape_cast %196 : vector<8x1xi1> to vector<8x1xi1>
    %198 = vector.broadcast %197 : vector<8x1xi1> to vector<8x32xi1>
    %199 = arith.select %198, %194, %163 : vector<8x32xi1>, vector<8x32xf32>
    %c0_68 = arith.constant 0 : index
    %c0_69 = arith.constant 0 : index
    %200 = vector.load %arg9[%c0_68, %c0_69] : memref<8x32xf32, #tpu.memory_space<vmem>>, vector<8x32xf32>
    tpu.vector_store %arg9[%c0_68, %c0_69], %199 {strides = array<i32>} : memref<8x32xf32, #tpu.memory_space<vmem>>, vector<8x32xf32>,
    %201 = vector.shape_cast %196 : vector<8x1xi1> to vector<8x1xi1>
    %202 = vector.broadcast %201 : vector<8x1xi1> to vector<8x32xi1>
    %203 = arith.select %202, %192, %164 : vector<8x32xi1>, vector<8x32xf32>
    %c0_70 = arith.constant 0 : index
    %c0_71 = arith.constant 0 : index
    %204 = vector.load %arg10[%c0_70, %c0_71] : memref<8x32xf32, #tpu.memory_space<vmem>>, vector<8x32xf32>
    tpu.vector_store %arg10[%c0_70, %c0_71], %203 {strides = array<i32>} : memref<8x32xf32, #tpu.memory_space<vmem>>, vector<8x32xf32>,
    %cst_72 = arith.constant 0.000000e+00 : f32
    %205 = vector.shape_cast %196 : vector<8x1xi1> to vector<8x1xi1>
    %206 = vector.broadcast %205 : vector<8x1xi1> to vector<8x32xi1>
    %207 = vector.broadcast %cst_72 : f32 to vector<8x32xf32>
    %208 = arith.select %206, %194, %207 : vector<8x32xi1>, vector<8x32xf32>
    %209 = arith.index_cast %c3_i32 : i32 to index
    %c0_73 = arith.constant 0 : index
    %c0_74 = arith.constant 0 : index
    %210 = vector.load %arg6[%209, %c0_73, %c0_74] : memref<8x8x32xf32, #tpu.memory_space<vmem>>, vector<1x8x32xf32>
    %211 = vector.shape_cast %210 : vector<1x8x32xf32> to vector<8x32xf32>
    %212 = vector.shape_cast %208 : vector<8x32xf32> to vector<1x8x32xf32>
    tpu.vector_store %arg6[%209, %c0_73, %c0_74], %212 {strides = array<i32>} : memref<8x8x32xf32, #tpu.memory_space<vmem>>, vector<1x8x32xf32>,
    %c4_i32 = arith.constant 4 : i32
    %c8_i32_75 = arith.constant 8 : i32
    %213 = arith.muli %arg0, %c8_i32_75 : i32
    %214 = arith.addi %213, %c4_i32 : i32
    %c0_76 = arith.constant 0 : index
    %c0_77 = arith.constant 0 : index
    %215 = vector.load %arg9[%c0_76, %c0_77] : memref<8x32xf32, #tpu.memory_space<vmem>>, vector<8x32xf32>
    %c0_78 = arith.constant 0 : index
    %c0_79 = arith.constant 0 : index
    %216 = vector.load %arg10[%c0_78, %c0_79] : memref<8x32xf32, #tpu.memory_space<vmem>>, vector<8x32xf32>
    %217 = arith.index_cast %c4_i32 : i32 to index
    %c0_80 = arith.constant 0 : index
    %c0_81 = arith.constant 0 : index
    %218 = vector.load %arg1[%217, %c0_80, %c0_81] : memref<8x8x128xf32, #tpu.memory_space<vmem>>, vector<1x8x128xf32>
    %219 = vector.shape_cast %218 : vector<1x8x128xf32> to vector<8x128xf32>
    %cst_82 = arith.constant dense<0.000000e+00> : vector<8x128xf32>
    %220 = tpu.matmul %215, %3, %cst_82 {dimension_numbers = #tpu.dot_dimension_numbers<[1], [0], [0], [1], [0, 0, 1, 1], [], []>} : vector<8x32xf32>, vector<32x128xf32>, vector<8x128xf32> -> vector<8x128xf32>
    %221 = arith.addf %219, %220 : vector<8x128xf32>
    %222 = vector.extract_strided_slice %221 {offsets = [0, 0], sizes = [8, 32], strides = [1, 1]} : vector<8x128xf32> to vector<8x32xf32>
    %223 = arith.negf %222 : vector<8x32xf32>
    %224 = math.exp %223 : vector<8x32xf32>
    %cst_83 = arith.constant 1.000000e+00 : f32
    %225 = vector.broadcast %cst_83 : f32 to vector<8x32xf32>
    %226 = arith.addf %225, %224 : vector<8x32xf32>
    %227 = arith.divf %225, %226 : vector<8x32xf32>
    %228 = vector.extract_strided_slice %221 {offsets = [0, 32], sizes = [8, 32], strides = [1, 1]} : vector<8x128xf32> to vector<8x32xf32>
    %229 = arith.negf %228 : vector<8x32xf32>
    %230 = math.exp %229 : vector<8x32xf32>
    %cst_84 = arith.constant 1.000000e+00 : f32
    %231 = vector.broadcast %cst_84 : f32 to vector<8x32xf32>
    %232 = arith.addf %231, %230 : vector<8x32xf32>
    %233 = arith.divf %231, %232 : vector<8x32xf32>
    %234 = vector.extract_strided_slice %221 {offsets = [0, 64], sizes = [8, 32], strides = [1, 1]} : vector<8x128xf32> to vector<8x32xf32>
    %235 = math.tanh %234 : vector<8x32xf32>
    %236 = vector.extract_strided_slice %221 {offsets = [0, 96], sizes = [8, 32], strides = [1, 1]} : vector<8x128xf32> to vector<8x32xf32>
    %237 = arith.negf %236 : vector<8x32xf32>
    %238 = math.exp %237 : vector<8x32xf32>
    %cst_85 = arith.constant 1.000000e+00 : f32
    %239 = vector.broadcast %cst_85 : f32 to vector<8x32xf32>
    %240 = arith.addf %239, %238 : vector<8x32xf32>
    %241 = arith.divf %239, %240 : vector<8x32xf32>
    %242 = arith.mulf %233, %216 : vector<8x32xf32>
    %243 = arith.mulf %227, %235 : vector<8x32xf32>
    %244 = arith.addf %242, %243 : vector<8x32xf32>
    %245 = math.tanh %244 : vector<8x32xf32>
    %246 = arith.mulf %241, %245 : vector<8x32xf32>
    %247 = vector.broadcast %214 : i32 to vector<8x1xi32>
    %248 = arith.cmpi slt, %247, %4 : vector<8x1xi32>
    %249 = vector.shape_cast %248 : vector<8x1xi1> to vector<8x1xi1>
    %250 = vector.broadcast %249 : vector<8x1xi1> to vector<8x32xi1>
    %251 = arith.select %250, %246, %215 : vector<8x32xi1>, vector<8x32xf32>
    %c0_86 = arith.constant 0 : index
    %c0_87 = arith.constant 0 : index
    %252 = vector.load %arg9[%c0_86, %c0_87] : memref<8x32xf32, #tpu.memory_space<vmem>>, vector<8x32xf32>
    tpu.vector_store %arg9[%c0_86, %c0_87], %251 {strides = array<i32>} : memref<8x32xf32, #tpu.memory_space<vmem>>, vector<8x32xf32>,
    %253 = vector.shape_cast %248 : vector<8x1xi1> to vector<8x1xi1>
    %254 = vector.broadcast %253 : vector<8x1xi1> to vector<8x32xi1>
    %255 = arith.select %254, %244, %216 : vector<8x32xi1>, vector<8x32xf32>
    %c0_88 = arith.constant 0 : index
    %c0_89 = arith.constant 0 : index
    %256 = vector.load %arg10[%c0_88, %c0_89] : memref<8x32xf32, #tpu.memory_space<vmem>>, vector<8x32xf32>
    tpu.vector_store %arg10[%c0_88, %c0_89], %255 {strides = array<i32>} : memref<8x32xf32, #tpu.memory_space<vmem>>, vector<8x32xf32>,
    %cst_90 = arith.constant 0.000000e+00 : f32
    %257 = vector.shape_cast %248 : vector<8x1xi1> to vector<8x1xi1>
    %258 = vector.broadcast %257 : vector<8x1xi1> to vector<8x32xi1>
    %259 = vector.broadcast %cst_90 : f32 to vector<8x32xf32>
    %260 = arith.select %258, %246, %259 : vector<8x32xi1>, vector<8x32xf32>
    %261 = arith.index_cast %c4_i32 : i32 to index
    %c0_91 = arith.constant 0 : index
    %c0_92 = arith.constant 0 : index
    %262 = vector.load %arg6[%261, %c0_91, %c0_92] : memref<8x8x32xf32, #tpu.memory_space<vmem>>, vector<1x8x32xf32>
    %263 = vector.shape_cast %262 : vector<1x8x32xf32> to vector<8x32xf32>
    %264 = vector.shape_cast %260 : vector<8x32xf32> to vector<1x8x32xf32>
    tpu.vector_store %arg6[%261, %c0_91, %c0_92], %264 {strides = array<i32>} : memref<8x8x32xf32, #tpu.memory_space<vmem>>, vector<1x8x32xf32>,
    %c5_i32 = arith.constant 5 : i32
    %c8_i32_93 = arith.constant 8 : i32
    %265 = arith.muli %arg0, %c8_i32_93 : i32
    %266 = arith.addi %265, %c5_i32 : i32
    %c0_94 = arith.constant 0 : index
    %c0_95 = arith.constant 0 : index
    %267 = vector.load %arg9[%c0_94, %c0_95] : memref<8x32xf32, #tpu.memory_space<vmem>>, vector<8x32xf32>
    %c0_96 = arith.constant 0 : index
    %c0_97 = arith.constant 0 : index
    %268 = vector.load %arg10[%c0_96, %c0_97] : memref<8x32xf32, #tpu.memory_space<vmem>>, vector<8x32xf32>
    %269 = arith.index_cast %c5_i32 : i32 to index
    %c0_98 = arith.constant 0 : index
    %c0_99 = arith.constant 0 : index
    %270 = vector.load %arg1[%269, %c0_98, %c0_99] : memref<8x8x128xf32, #tpu.memory_space<vmem>>, vector<1x8x128xf32>
    %271 = vector.shape_cast %270 : vector<1x8x128xf32> to vector<8x128xf32>
    %cst_100 = arith.constant dense<0.000000e+00> : vector<8x128xf32>
    %272 = tpu.matmul %267, %3, %cst_100 {dimension_numbers = #tpu.dot_dimension_numbers<[1], [0], [0], [1], [0, 0, 1, 1], [], []>} : vector<8x32xf32>, vector<32x128xf32>, vector<8x128xf32> -> vector<8x128xf32>
    %273 = arith.addf %271, %272 : vector<8x128xf32>
    %274 = vector.extract_strided_slice %273 {offsets = [0, 0], sizes = [8, 32], strides = [1, 1]} : vector<8x128xf32> to vector<8x32xf32>
    %275 = arith.negf %274 : vector<8x32xf32>
    %276 = math.exp %275 : vector<8x32xf32>
    %cst_101 = arith.constant 1.000000e+00 : f32
    %277 = vector.broadcast %cst_101 : f32 to vector<8x32xf32>
    %278 = arith.addf %277, %276 : vector<8x32xf32>
    %279 = arith.divf %277, %278 : vector<8x32xf32>
    %280 = vector.extract_strided_slice %273 {offsets = [0, 32], sizes = [8, 32], strides = [1, 1]} : vector<8x128xf32> to vector<8x32xf32>
    %281 = arith.negf %280 : vector<8x32xf32>
    %282 = math.exp %281 : vector<8x32xf32>
    %cst_102 = arith.constant 1.000000e+00 : f32
    %283 = vector.broadcast %cst_102 : f32 to vector<8x32xf32>
    %284 = arith.addf %283, %282 : vector<8x32xf32>
    %285 = arith.divf %283, %284 : vector<8x32xf32>
    %286 = vector.extract_strided_slice %273 {offsets = [0, 64], sizes = [8, 32], strides = [1, 1]} : vector<8x128xf32> to vector<8x32xf32>
    %287 = math.tanh %286 : vector<8x32xf32>
    %288 = vector.extract_strided_slice %273 {offsets = [0, 96], sizes = [8, 32], strides = [1, 1]} : vector<8x128xf32> to vector<8x32xf32>
    %289 = arith.negf %288 : vector<8x32xf32>
    %290 = math.exp %289 : vector<8x32xf32>
    %cst_103 = arith.constant 1.000000e+00 : f32
    %291 = vector.broadcast %cst_103 : f32 to vector<8x32xf32>
    %292 = arith.addf %291, %290 : vector<8x32xf32>
    %293 = arith.divf %291, %292 : vector<8x32xf32>
    %294 = arith.mulf %285, %268 : vector<8x32xf32>
    %295 = arith.mulf %279, %287 : vector<8x32xf32>
    %296 = arith.addf %294, %295 : vector<8x32xf32>
    %297 = math.tanh %296 : vector<8x32xf32>
    %298 = arith.mulf %293, %297 : vector<8x32xf32>
    %299 = vector.broadcast %266 : i32 to vector<8x1xi32>
    %300 = arith.cmpi slt, %299, %4 : vector<8x1xi32>
    %301 = vector.shape_cast %300 : vector<8x1xi1> to vector<8x1xi1>
    %302 = vector.broadcast %301 : vector<8x1xi1> to vector<8x32xi1>
    %303 = arith.select %302, %298, %267 : vector<8x32xi1>, vector<8x32xf32>
    %c0_104 = arith.constant 0 : index
    %c0_105 = arith.constant 0 : index
    %304 = vector.load %arg9[%c0_104, %c0_105] : memref<8x32xf32, #tpu.memory_space<vmem>>, vector<8x32xf32>
    tpu.vector_store %arg9[%c0_104, %c0_105], %303 {strides = array<i32>} : memref<8x32xf32, #tpu.memory_space<vmem>>, vector<8x32xf32>,
    %305 = vector.shape_cast %300 : vector<8x1xi1> to vector<8x1xi1>
    %306 = vector.broadcast %305 : vector<8x1xi1> to vector<8x32xi1>
    %307 = arith.select %306, %296, %268 : vector<8x32xi1>, vector<8x32xf32>
    %c0_106 = arith.constant 0 : index
    %c0_107 = arith.constant 0 : index
    %308 = vector.load %arg10[%c0_106, %c0_107] : memref<8x32xf32, #tpu.memory_space<vmem>>, vector<8x32xf32>
    tpu.vector_store %arg10[%c0_106, %c0_107], %307 {strides = array<i32>} : memref<8x32xf32, #tpu.memory_space<vmem>>, vector<8x32xf32>,
    %cst_108 = arith.constant 0.000000e+00 : f32
    %309 = vector.shape_cast %300 : vector<8x1xi1> to vector<8x1xi1>
    %310 = vector.broadcast %309 : vector<8x1xi1> to vector<8x32xi1>
    %311 = vector.broadcast %cst_108 : f32 to vector<8x32xf32>
    %312 = arith.select %310, %298, %311 : vector<8x32xi1>, vector<8x32xf32>
    %313 = arith.index_cast %c5_i32 : i32 to index
    %c0_109 = arith.constant 0 : index
    %c0_110 = arith.constant 0 : index
    %314 = vector.load %arg6[%313, %c0_109, %c0_110] : memref<8x8x32xf32, #tpu.memory_space<vmem>>, vector<1x8x32xf32>
    %315 = vector.shape_cast %314 : vector<1x8x32xf32> to vector<8x32xf32>
    %316 = vector.shape_cast %312 : vector<8x32xf32> to vector<1x8x32xf32>
    tpu.vector_store %arg6[%313, %c0_109, %c0_110], %316 {strides = array<i32>} : memref<8x8x32xf32, #tpu.memory_space<vmem>>, vector<1x8x32xf32>,
    %c6_i32 = arith.constant 6 : i32
    %c8_i32_111 = arith.constant 8 : i32
    %317 = arith.muli %arg0, %c8_i32_111 : i32
    %318 = arith.addi %317, %c6_i32 : i32
    %c0_112 = arith.constant 0 : index
    %c0_113 = arith.constant 0 : index
    %319 = vector.load %arg9[%c0_112, %c0_113] : memref<8x32xf32, #tpu.memory_space<vmem>>, vector<8x32xf32>
    %c0_114 = arith.constant 0 : index
    %c0_115 = arith.constant 0 : index
    %320 = vector.load %arg10[%c0_114, %c0_115] : memref<8x32xf32, #tpu.memory_space<vmem>>, vector<8x32xf32>
    %321 = arith.index_cast %c6_i32 : i32 to index
    %c0_116 = arith.constant 0 : index
    %c0_117 = arith.constant 0 : index
    %322 = vector.load %arg1[%321, %c0_116, %c0_117] : memref<8x8x128xf32, #tpu.memory_space<vmem>>, vector<1x8x128xf32>
    %323 = vector.shape_cast %322 : vector<1x8x128xf32> to vector<8x128xf32>
    %cst_118 = arith.constant dense<0.000000e+00> : vector<8x128xf32>
    %324 = tpu.matmul %319, %3, %cst_118 {dimension_numbers = #tpu.dot_dimension_numbers<[1], [0], [0], [1], [0, 0, 1, 1], [], []>} : vector<8x32xf32>, vector<32x128xf32>, vector<8x128xf32> -> vector<8x128xf32>
    %325 = arith.addf %323, %324 : vector<8x128xf32>
    %326 = vector.extract_strided_slice %325 {offsets = [0, 0], sizes = [8, 32], strides = [1, 1]} : vector<8x128xf32> to vector<8x32xf32>
    %327 = arith.negf %326 : vector<8x32xf32>
    %328 = math.exp %327 : vector<8x32xf32>
    %cst_119 = arith.constant 1.000000e+00 : f32
    %329 = vector.broadcast %cst_119 : f32 to vector<8x32xf32>
    %330 = arith.addf %329, %328 : vector<8x32xf32>
    %331 = arith.divf %329, %330 : vector<8x32xf32>
    %332 = vector.extract_strided_slice %325 {offsets = [0, 32], sizes = [8, 32], strides = [1, 1]} : vector<8x128xf32> to vector<8x32xf32>
    %333 = arith.negf %332 : vector<8x32xf32>
    %334 = math.exp %333 : vector<8x32xf32>
    %cst_120 = arith.constant 1.000000e+00 : f32
    %335 = vector.broadcast %cst_120 : f32 to vector<8x32xf32>
    %336 = arith.addf %335, %334 : vector<8x32xf32>
    %337 = arith.divf %335, %336 : vector<8x32xf32>
    %338 = vector.extract_strided_slice %325 {offsets = [0, 64], sizes = [8, 32], strides = [1, 1]} : vector<8x128xf32> to vector<8x32xf32>
    %339 = math.tanh %338 : vector<8x32xf32>
    %340 = vector.extract_strided_slice %325 {offsets = [0, 96], sizes = [8, 32], strides = [1, 1]} : vector<8x128xf32> to vector<8x32xf32>
    %341 = arith.negf %340 : vector<8x32xf32>
    %342 = math.exp %341 : vector<8x32xf32>
    %cst_121 = arith.constant 1.000000e+00 : f32
    %343 = vector.broadcast %cst_121 : f32 to vector<8x32xf32>
    %344 = arith.addf %343, %342 : vector<8x32xf32>
    %345 = arith.divf %343, %344 : vector<8x32xf32>
    %346 = arith.mulf %337, %320 : vector<8x32xf32>
    %347 = arith.mulf %331, %339 : vector<8x32xf32>
    %348 = arith.addf %346, %347 : vector<8x32xf32>
    %349 = math.tanh %348 : vector<8x32xf32>
    %350 = arith.mulf %345, %349 : vector<8x32xf32>
    %351 = vector.broadcast %318 : i32 to vector<8x1xi32>
    %352 = arith.cmpi slt, %351, %4 : vector<8x1xi32>
    %353 = vector.shape_cast %352 : vector<8x1xi1> to vector<8x1xi1>
    %354 = vector.broadcast %353 : vector<8x1xi1> to vector<8x32xi1>
    %355 = arith.select %354, %350, %319 : vector<8x32xi1>, vector<8x32xf32>
    %c0_122 = arith.constant 0 : index
    %c0_123 = arith.constant 0 : index
    %356 = vector.load %arg9[%c0_122, %c0_123] : memref<8x32xf32, #tpu.memory_space<vmem>>, vector<8x32xf32>
    tpu.vector_store %arg9[%c0_122, %c0_123], %355 {strides = array<i32>} : memref<8x32xf32, #tpu.memory_space<vmem>>, vector<8x32xf32>,
    %357 = vector.shape_cast %352 : vector<8x1xi1> to vector<8x1xi1>
    %358 = vector.broadcast %357 : vector<8x1xi1> to vector<8x32xi1>
    %359 = arith.select %358, %348, %320 : vector<8x32xi1>, vector<8x32xf32>
    %c0_124 = arith.constant 0 : index
    %c0_125 = arith.constant 0 : index
    %360 = vector.load %arg10[%c0_124, %c0_125] : memref<8x32xf32, #tpu.memory_space<vmem>>, vector<8x32xf32>
    tpu.vector_store %arg10[%c0_124, %c0_125], %359 {strides = array<i32>} : memref<8x32xf32, #tpu.memory_space<vmem>>, vector<8x32xf32>,
    %cst_126 = arith.constant 0.000000e+00 : f32
    %361 = vector.shape_cast %352 : vector<8x1xi1> to vector<8x1xi1>
    %362 = vector.broadcast %361 : vector<8x1xi1> to vector<8x32xi1>
    %363 = vector.broadcast %cst_126 : f32 to vector<8x32xf32>
    %364 = arith.select %362, %350, %363 : vector<8x32xi1>, vector<8x32xf32>
    %365 = arith.index_cast %c6_i32 : i32 to index
    %c0_127 = arith.constant 0 : index
    %c0_128 = arith.constant 0 : index
    %366 = vector.load %arg6[%365, %c0_127, %c0_128] : memref<8x8x32xf32, #tpu.memory_space<vmem>>, vector<1x8x32xf32>
    %367 = vector.shape_cast %366 : vector<1x8x32xf32> to vector<8x32xf32>
    %368 = vector.shape_cast %364 : vector<8x32xf32> to vector<1x8x32xf32>
    tpu.vector_store %arg6[%365, %c0_127, %c0_128], %368 {strides = array<i32>} : memref<8x8x32xf32, #tpu.memory_space<vmem>>, vector<1x8x32xf32>,
    %c7_i32 = arith.constant 7 : i32
    %c8_i32_129 = arith.constant 8 : i32
    %369 = arith.muli %arg0, %c8_i32_129 : i32
    %370 = arith.addi %369, %c7_i32 : i32
    %c0_130 = arith.constant 0 : index
    %c0_131 = arith.constant 0 : index
    %371 = vector.load %arg9[%c0_130, %c0_131] : memref<8x32xf32, #tpu.memory_space<vmem>>, vector<8x32xf32>
    %c0_132 = arith.constant 0 : index
    %c0_133 = arith.constant 0 : index
    %372 = vector.load %arg10[%c0_132, %c0_133] : memref<8x32xf32, #tpu.memory_space<vmem>>, vector<8x32xf32>
    %373 = arith.index_cast %c7_i32 : i32 to index
    %c0_134 = arith.constant 0 : index
    %c0_135 = arith.constant 0 : index
    %374 = vector.load %arg1[%373, %c0_134, %c0_135] : memref<8x8x128xf32, #tpu.memory_space<vmem>>, vector<1x8x128xf32>
    %375 = vector.shape_cast %374 : vector<1x8x128xf32> to vector<8x128xf32>
    %cst_136 = arith.constant dense<0.000000e+00> : vector<8x128xf32>
    %376 = tpu.matmul %371, %3, %cst_136 {dimension_numbers = #tpu.dot_dimension_numbers<[1], [0], [0], [1], [0, 0, 1, 1], [], []>} : vector<8x32xf32>, vector<32x128xf32>, vector<8x128xf32> -> vector<8x128xf32>
    %377 = arith.addf %375, %376 : vector<8x128xf32>
    %378 = vector.extract_strided_slice %377 {offsets = [0, 0], sizes = [8, 32], strides = [1, 1]} : vector<8x128xf32> to vector<8x32xf32>
    %379 = arith.negf %378 : vector<8x32xf32>
    %380 = math.exp %379 : vector<8x32xf32>
    %cst_137 = arith.constant 1.000000e+00 : f32
    %381 = vector.broadcast %cst_137 : f32 to vector<8x32xf32>
    %382 = arith.addf %381, %380 : vector<8x32xf32>
    %383 = arith.divf %381, %382 : vector<8x32xf32>
    %384 = vector.extract_strided_slice %377 {offsets = [0, 32], sizes = [8, 32], strides = [1, 1]} : vector<8x128xf32> to vector<8x32xf32>
    %385 = arith.negf %384 : vector<8x32xf32>
    %386 = math.exp %385 : vector<8x32xf32>
    %cst_138 = arith.constant 1.000000e+00 : f32
    %387 = vector.broadcast %cst_138 : f32 to vector<8x32xf32>
    %388 = arith.addf %387, %386 : vector<8x32xf32>
    %389 = arith.divf %387, %388 : vector<8x32xf32>
    %390 = vector.extract_strided_slice %377 {offsets = [0, 64], sizes = [8, 32], strides = [1, 1]} : vector<8x128xf32> to vector<8x32xf32>
    %391 = math.tanh %390 : vector<8x32xf32>
    %392 = vector.extract_strided_slice %377 {offsets = [0, 96], sizes = [8, 32], strides = [1, 1]} : vector<8x128xf32> to vector<8x32xf32>
    %393 = arith.negf %392 : vector<8x32xf32>
    %394 = math.exp %393 : vector<8x32xf32>
    %cst_139 = arith.constant 1.000000e+00 : f32
    %395 = vector.broadcast %cst_139 : f32 to vector<8x32xf32>
    %396 = arith.addf %395, %394 : vector<8x32xf32>
    %397 = arith.divf %395, %396 : vector<8x32xf32>
    %398 = arith.mulf %389, %372 : vector<8x32xf32>
    %399 = arith.mulf %383, %391 : vector<8x32xf32>
    %400 = arith.addf %398, %399 : vector<8x32xf32>
    %401 = math.tanh %400 : vector<8x32xf32>
    %402 = arith.mulf %397, %401 : vector<8x32xf32>
    %403 = vector.broadcast %370 : i32 to vector<8x1xi32>
    %404 = arith.cmpi slt, %403, %4 : vector<8x1xi32>
    %405 = vector.shape_cast %404 : vector<8x1xi1> to vector<8x1xi1>
    %406 = vector.broadcast %405 : vector<8x1xi1> to vector<8x32xi1>
    %407 = arith.select %406, %402, %371 : vector<8x32xi1>, vector<8x32xf32>
    %c0_140 = arith.constant 0 : index
    %c0_141 = arith.constant 0 : index
    %408 = vector.load %arg9[%c0_140, %c0_141] : memref<8x32xf32, #tpu.memory_space<vmem>>, vector<8x32xf32>
    tpu.vector_store %arg9[%c0_140, %c0_141], %407 {strides = array<i32>} : memref<8x32xf32, #tpu.memory_space<vmem>>, vector<8x32xf32>,
    %409 = vector.shape_cast %404 : vector<8x1xi1> to vector<8x1xi1>
    %410 = vector.broadcast %409 : vector<8x1xi1> to vector<8x32xi1>
    %411 = arith.select %410, %400, %372 : vector<8x32xi1>, vector<8x32xf32>
    %c0_142 = arith.constant 0 : index
    %c0_143 = arith.constant 0 : index
    %412 = vector.load %arg10[%c0_142, %c0_143] : memref<8x32xf32, #tpu.memory_space<vmem>>, vector<8x32xf32>
    tpu.vector_store %arg10[%c0_142, %c0_143], %411 {strides = array<i32>} : memref<8x32xf32, #tpu.memory_space<vmem>>, vector<8x32xf32>,
    %cst_144 = arith.constant 0.000000e+00 : f32
    %413 = vector.shape_cast %404 : vector<8x1xi1> to vector<8x1xi1>
    %414 = vector.broadcast %413 : vector<8x1xi1> to vector<8x32xi1>
    %415 = vector.broadcast %cst_144 : f32 to vector<8x32xf32>
    %416 = arith.select %414, %402, %415 : vector<8x32xi1>, vector<8x32xf32>
    %417 = arith.index_cast %c7_i32 : i32 to index
    %c0_145 = arith.constant 0 : index
    %c0_146 = arith.constant 0 : index
    %418 = vector.load %arg6[%417, %c0_145, %c0_146] : memref<8x8x32xf32, #tpu.memory_space<vmem>>, vector<1x8x32xf32>
    %419 = vector.shape_cast %418 : vector<1x8x32xf32> to vector<8x32xf32>
    %420 = vector.shape_cast %416 : vector<8x32xf32> to vector<1x8x32xf32>
    tpu.vector_store %arg6[%417, %c0_145, %c0_146], %420 {strides = array<i32>} : memref<8x8x32xf32, #tpu.memory_space<vmem>>, vector<1x8x32xf32>,
    %c8_i32_147 = arith.constant 8 : i32
    %c0_i32_148 = arith.constant 0 : i32
    %421 = arith.cmpi eq, %arg0, %c0_i32_148 : i32
    %422 = arith.extui %421 : i1 to i32
    %c0_i32_149 = arith.constant 0 : i32
    %423 = arith.cmpi ne, %422, %c0_i32_149 : i32
    scf.if %423 {
      %c0_150 = arith.constant 0 : index
      %c0_151 = arith.constant 0 : index
      %424 = vector.load %arg9[%c0_150, %c0_151] : memref<8x32xf32, #tpu.memory_space<vmem>>, vector<8x32xf32>
      %c0_152 = arith.constant 0 : index
      %c0_153 = arith.constant 0 : index
      %425 = vector.load %arg7[%c0_152, %c0_153] : memref<8x32xf32, #tpu.memory_space<vmem>>, vector<8x32xf32>
      tpu.vector_store %arg7[%c0_152, %c0_153], %424 {strides = array<i32>} : memref<8x32xf32, #tpu.memory_space<vmem>>, vector<8x32xf32>,
      %c0_154 = arith.constant 0 : index
      %c0_155 = arith.constant 0 : index
      %426 = vector.load %arg10[%c0_154, %c0_155] : memref<8x32xf32, #tpu.memory_space<vmem>>, vector<8x32xf32>
      %c0_156 = arith.constant 0 : index
      %c0_157 = arith.constant 0 : index
      %427 = vector.load %arg8[%c0_156, %c0_157] : memref<8x32xf32, #tpu.memory_space<vmem>>, vector<8x32xf32>
      tpu.vector_store %arg8[%c0_156, %c0_157], %426 {strides = array<i32>} : memref<8x32xf32, #tpu.memory_space<vmem>>, vector<8x32xf32>,
    } else {
    }
    return
  }
  func.func @transform_0(%arg0: i32) -> (i32, i32, i32) {
    %c0_i32 = arith.constant 0 : i32
    %c0_i32_0 = arith.constant 0 : i32
    %c0_i32_1 = arith.constant 0 : i32
    return %arg0, %c0_i32, %c0_i32_0 : i32, i32, i32
  }
  func.func @transform_1(%arg0: i32) -> (i32, i32) {
    %c0_i32 = arith.constant 0 : i32
    %c0_i32_0 = arith.constant 0 : i32
    %c0_i32_1 = arith.constant 0 : i32
    return %c0_i32, %c0_i32_0 : i32, i32
  }
  func.func @transform_2(%arg0: i32) -> (i32, i32) {
    %c0_i32 = arith.constant 0 : i32
    %c0_i32_0 = arith.constant 0 : i32
    %c0_i32_1 = arith.constant 0 : i32
    return %c0_i32, %c0_i32_0 : i32, i32
  }
  func.func @transform_3(%arg0: i32) -> (i32, i32) {
    %c0_i32 = arith.constant 0 : i32
    %c0_i32_0 = arith.constant 0 : i32
    %c0_i32_1 = arith.constant 0 : i32
    return %c0_i32, %c0_i32_0 : i32, i32
  }
  func.func @transform_4(%arg0: i32) -> (i32, i32) {
    %c0_i32 = arith.constant 0 : i32
    %c0_i32_0 = arith.constant 0 : i32
    %c0_i32_1 = arith.constant 0 : i32
    return %c0_i32, %c0_i32_0 : i32, i32
  }
  func.func @transform_5(%arg0: i32) -> (i32, i32, i32) {
    %c0_i32 = arith.constant 0 : i32
    %c0_i32_0 = arith.constant 0 : i32
    %c0_i32_1 = arith.constant 0 : i32
    return %arg0, %c0_i32, %c0_i32_0 : i32, i32, i32
  }
  func.func @transform_6(%arg0: i32) -> (i32, i32) {
    %c0_i32 = arith.constant 0 : i32
    %c0_i32_0 = arith.constant 0 : i32
    %c0_i32_1 = arith.constant 0 : i32
    return %c0_i32, %c0_i32_0 : i32, i32
  }
  func.func @transform_7(%arg0: i32) -> (i32, i32) {
    %c0_i32 = arith.constant 0 : i32
    %c0_i32_0 = arith.constant 0 : i32
    %c0_i32_1 = arith.constant 0 : i32
    return %c0_i32, %c0_i32_0 : i32, i32
  }
}

</mosaic_0001>

<llo_original>
// kernel: decoder_forward.5
$region0: #{decoder_forward.5}
  #allocation0 [shape = 'u32[]', space=smem, size = 0x4, offset = 0x4, fixed_abs, tag = 'smem constant byte address 0x4 - core index']
  #allocation1 [shape = 'u32[72,128]{1,0:T(1,128)}', space=vmem, size = 0x9000, scoped, tag = 'internal scratch']
  %s0 = inlined_call_operand.vmem [shape: f32[16,32], index: 0, kind: input, shape index: {}]
  %s1 = inlined_call_operand.vmem [shape: f32[32,16], index: 1, kind: input, shape index: {}]
  %s2 = inlined_call_operand.vmem [shape: f32[1,16], index: 2, kind: input, shape index: {}]
  %s3 = inlined_call_operand.hbm [shape: f32[16,16], index: 3, kind: output, shape index: {}]
  %s4 = sld [smem:[#allocation0]]
  $region22: #{decoder_forward.5} parent=0
    _
  %s6 = ssub.s32 1, %s4
  %s7 = scalar_select 0, %s6, %s4
  $region1: #{decoder_forward.5} parent=0
    #allocation2 [shape = 'u8[8192]{0}', space=vmem, size = 0x2000, scoped, tag = 'output window, operand 0, single buffered']
    #allocation3 [shape = 's32[1]{0}', space=sflag, size = 0x4, scoped, tag = 'scoped memory for decoder_forward.5']
    %8 = vsyncpa [#allocation3], 0
    // Predicated region
    $region2: #{decoder_forward.5} parent=1 // pred_check
      _
    $region3: #{decoder_forward.5} parent=1 // pred_check_branch
      %10 = sbr.rel (0) target = $region5
    $region4: #{decoder_forward.5} parent=1 // pred_region
      _
    $region5: #{decoder_forward.5} parent=1 // pred_fallthru
      _
    // Predicated region
    $region6: #{decoder_forward.5} parent=1 // pred_check
      _
    $region7: #{decoder_forward.5} parent=1 // pred_check_branch
      %12 = sbr.rel (0) target = $region9
    $region8: #{decoder_forward.5} parent=1 // pred_region
      _
    $region9: #{decoder_forward.5} parent=1 // pred_fallthru
      _
    // Predicated region
    $region10: #{decoder_forward.5} parent=1 // pred_check
      _
    $region11: #{decoder_forward.5} parent=1 // pred_check_branch
      %14 = sbr.rel (0) target = $region13
    $region12: #{decoder_forward.5} parent=1 // pred_region
      _
    $region13: #{decoder_forward.5} parent=1 // pred_fallthru
      _
    %v15 = vld [vmem:[%s0] sm:$0xff]
    %v16 = vld [vmem:[%s0 + $0x8] sm:$0xff]
    %v17 = vld [vmem:[%s1] sm:$0xff]
    %v18 = vld [vmem:[%s1 + $0x8] sm:$0xff]
    %v19 = vld [vmem:[%s1 + $0x10] sm:$0xff]
    %v20 = vld [vmem:[%s1 + $0x18] sm:$0xff]
    %v21 = vld [vmem:[%s2] sm:$0x1]
    %v23 = vperm.slane %v21, 0
    %vm25 = vcmask 261120
    %v27 = vsel %vm25, %v15, 0
    %v30 = vsel %vm25, %v16, 0
    %32 = vmatpush.msra.mxu0 0.0
    %33 = vmatpush.msra.mxu0 0.0
    %34 = vmatpush.msra.mxu0 0.0
    %35 = vmatpush.msra.mxu0 0.0
    %36 = vmatpush.msra.mxu0 0.0
    %37 = vmatpush.msra.mxu0 0.0
    %38 = vmatpush.msra.mxu0 0.0
    %39 = vmatpush.msra.mxu0 0.0
    %40 = vmatpush.msra.mxu0 0.0
    %41 = vmatpush.msra.mxu0 0.0
    %42 = vmatpush.msra.mxu0 0.0
    %43 = vmatpush.msra.mxu0 0.0
    %44 = vmatpush.msra.mxu0 %v20
    %45 = vmatpush.msra.mxu0 %v19
    %46 = vmatpush.msra.mxu0 %v18
    %47 = vmatpush.msra.mxu0 %v17
    %48 = vmatmul.f32.gmra.mxu0 %v27
    %v49 = vpop.f32.mrf.mxu0
    %v50 = vadd.f32 %v23, %v49
    %51 = vmatmul.f32.gmra.mxu0 %v30
    %v52 = vpop.f32.mrf.mxu0
    %v53 = vadd.f32 %v23, %v52
    %54 = vdwg.mxu0
    %vm55 = vcmask 130048
    %56 = vst.msk [vmem:[#allocation2] sm:$0xff] %vm55, %v50
    %57 = vst.msk [vmem:[#allocation2 + $0x8] sm:$0xff] %vm55, %v53
    // Predicated region
    $region14: #{decoder_forward.5} parent=1 // pred_check
      _
    $region15: #{decoder_forward.5} parent=1 // pred_check_branch
      %59 = sbr.rel (0) target = $region17
    $region16: #{decoder_forward.5} parent=1 // pred_region
      %61 = vsyncadd [#allocation3], 0
      %s62 = sshll.u32 [#allocation2], 4
      %s63 = int_to_ptr.vmem [resolvable:$true] %s62
      %s64 = sshll.u32 %s3, 4
      %s65 = int_to_ptr.hbm [resolvable:$true] %s64
      %70 = dma.vmem_to_hbm [thread:$0]  %s63, 256, %s65, [#allocation3], 128, 128, 8
    $region17: #{decoder_forward.5} parent=1 // pred_fallthru
      _
    // Predicated region
    $region18: #{decoder_forward.5} parent=1 // pred_check
      _
    $region19: #{decoder_forward.5} parent=1 // pred_check_branch
      %72 = sbr.rel (0) target = $region21
    $region20: #{decoder_forward.5} parent=1 // pred_region
      %74 = dma.done [#allocation3], 256
    $region21: #{decoder_forward.5} parent=1 // pred_fallthru
      _
    %75 = vsyncpa [#allocation3], 1

// kernel: decoder_forward.3
$region0: #{decoder_forward.3}
  #allocation0 [shape = 'u32[]', space=smem, size = 0x4, offset = 0x4, fixed_abs, tag = 'smem constant byte address 0x4 - core index']
  #allocation1 [shape = 'u32[72,128]{1,0:T(1,128)}', space=vmem, size = 0x9000, scoped, tag = 'internal scratch']
  %s0 = inlined_call_operand.vmem [shape: f32[16,32], index: 0, kind: input, shape index: {}]
  %s1 = inlined_call_operand.vmem [shape: f32[32,128], index: 1, kind: input, shape index: {}]
  %s2 = inlined_call_operand.vmem [shape: f32[1,128], index: 2, kind: input, shape index: {}]
  %s3 = inlined_call_operand.vmem [shape: f32[16,128], index: 3, kind: output, shape index: {}]
  %s4 = sld [smem:[#allocation0]]
  $region22: #{decoder_forward.3} parent=0
    _
  %s6 = ssub.s32 1, %s4
  %s7 = scalar_select 0, %s6, %s4
  // Predicated region
  $region2: #{decoder_forward.3} parent=0 // pred_check
    _
  $region3: #{decoder_forward.3} parent=0 // pred_check_branch
    %9 = sbr.rel (0) target = $region5
  $region4: #{decoder_forward.3} parent=0 // pred_region
    _
  $region5: #{decoder_forward.3} parent=0 // pred_fallthru
    _
  // Predicated region
  $region6: #{decoder_forward.3} parent=0 // pred_check
    _
  $region7: #{decoder_forward.3} parent=0 // pred_check_branch
    %11 = sbr.rel (0) target = $region9
  $region8: #{decoder_forward.3} parent=0 // pred_region
    _
  $region9: #{decoder_forward.3} parent=0 // pred_fallthru
    _
  // Predicated region
  $region10: #{decoder_forward.3} parent=0 // pred_check
    _
  $region11: #{decoder_forward.3} parent=0 // pred_check_branch
    %13 = sbr.rel (0) target = $region13
  $region12: #{decoder_forward.3} parent=0 // pred_region
    _
  $region13: #{decoder_forward.3} parent=0 // pred_fallthru
    _
  %v14 = vld [vmem:[%s0] sm:$0xff]
  %v15 = vld [vmem:[%s0 + $0x8] sm:$0xff]
  %v16 = vld [vmem:[%s1] sm:$0xff]
  %v17 = vld [vmem:[%s1 + $0x8] sm:$0xff]
  %v18 = vld [vmem:[%s1 + $0x10] sm:$0xff]
  %v19 = vld [vmem:[%s1 + $0x18] sm:$0xff]
  %v20 = vld [vmem:[%s2] sm:$0x1]
  %v22 = vperm.slane %v20, 0
  %vm24 = vcmask 261120
  %v26 = vsel %vm24, %v14, 0
  %v29 = vsel %vm24, %v15, 0
  %31 = vmatpush.msra.mxu0 0.0
  %32 = vmatpush.msra.mxu0 0.0
  %33 = vmatpush.msra.mxu0 0.0
  %34 = vmatpush.msra.mxu0 0.0
  %35 = vmatpush.msra.mxu0 0.0
  %36 = vmatpush.msra.mxu0 0.0
  %37 = vmatpush.msra.mxu0 0.0
  %38 = vmatpush.msra.mxu0 0.0
  %39 = vmatpush.msra.mxu0 0.0
  %40 = vmatpush.msra.mxu0 0.0
  %41 = vmatpush.msra.mxu0 0.0
  %42 = vmatpush.msra.mxu0 0.0
  %43 = vmatpush.msra.mxu0 %v19
  %44 = vmatpush.msra.mxu0 %v18
  %45 = vmatpush.msra.mxu0 %v17
  %46 = vmatpush.msra.mxu0 %v16
  %47 = vmatmul.f32.gmra.mxu0 %v26
  %v48 = vpop.f32.mrf.mxu0
  %v49 = vadd.f32 %v22, %v48
  %50 = vmatmul.f32.gmra.mxu0 %v29
  %v51 = vpop.f32.mrf.mxu0
  %v52 = vadd.f32 %v22, %v51
  %53 = vdwg.mxu0
  %54 = vst [vmem:[%s3] sm:$0xff] %v49
  %55 = vst [vmem:[%s3 + $0x8] sm:$0xff] %v52
  // Predicated region
  $region14: #{decoder_forward.3} parent=0 // pred_check
    _
  $region15: #{decoder_forward.3} parent=0 // pred_check_branch
    %57 = sbr.rel (0) target = $region17
  $region16: #{decoder_forward.3} parent=0 // pred_region
    _
  $region17: #{decoder_forward.3} parent=0 // pred_fallthru
    _
  // Predicated region
  $region18: #{decoder_forward.3} parent=0 // pred_check
    _
  $region19: #{decoder_forward.3} parent=0 // pred_check_branch
    %59 = sbr.rel (0) target = $region21
  $region20: #{decoder_forward.3} parent=0 // pred_region
    _
  $region21: #{decoder_forward.3} parent=0 // pred_fallthru
    _

// kernel: decoder_forward.4
$region0: #{decoder_forward.4}
  #allocation0 [shape = 'u32[]', space=smem, size = 0x4, offset = 0x4, fixed_abs, tag = 'smem constant byte address 0x4 - core index']
  #allocation1 [shape = 'u32[72,128]{1,0:T(1,128)}', space=vmem, size = 0x9000, scoped, tag = 'internal scratch']
  #allocation2 [shape = 'f32[8,32]{1,0:T(8,128)}', space=vmem, size = 0x1000, scoped, tag = 'scratch operand']
  #allocation3 [shape = 'f32[8,32]{1,0:T(8,128)}', space=vmem, size = 0x1000, scoped, tag = 'scratch operand']
  %s0 = inlined_call_operand.vmem [shape: f32[8,8,128], index: 0, kind: input, shape index: {}]
  %s1 = inlined_call_operand.vmem [shape: f32[32,128], index: 1, kind: input, shape index: {}]
  %s2 = inlined_call_operand.vmem [shape: s32[8,1], index: 2, kind: input, shape index: {}]
  %s3 = inlined_call_operand.vmem [shape: f32[8,32], index: 3, kind: input, shape index: {}]
  %s4 = inlined_call_operand.vmem [shape: f32[8,32], index: 4, kind: input, shape index: {}]
  %s5 = inlined_call_operand.vmem [shape: f32[8,8,32], index: 5, kind: output, shape index: {0}]
  %s6 = inlined_call_operand.vmem [shape: f32[8,32], index: 6, kind: output, shape index: {1}]
  %s7 = inlined_call_operand.vmem [shape: f32[8,32], index: 7, kind: output, shape index: {2}]
  %8 = xla_tuple %s5, %s6, %s7
  %s9 = sld [smem:[#allocation0]]
  $region54: #{decoder_forward.4} parent=0
    _
  %s11 = ssub.s32 1, %s9
  %s12 = scalar_select 0, %s11, %s9
  // Predicated region
  $region2: #{decoder_forward.4} parent=0 // pred_check
    _
  $region3: #{decoder_forward.4} parent=0 // pred_check_branch
    %14 = sbr.rel (0) target = $region5
  $region4: #{decoder_forward.4} parent=0 // pred_region
    _
  $region5: #{decoder_forward.4} parent=0 // pred_fallthru
    _
  // Predicated region
  $region6: #{decoder_forward.4} parent=0 // pred_check
    _
  $region7: #{decoder_forward.4} parent=0 // pred_check_branch
    %16 = sbr.rel (0) target = $region9
  $region8: #{decoder_forward.4} parent=0 // pred_region
    _
  $region9: #{decoder_forward.4} parent=0 // pred_fallthru
    _
  // Predicated region
  $region10: #{decoder_forward.4} parent=0 // pred_check
    _
  $region11: #{decoder_forward.4} parent=0 // pred_check_branch
    %18 = sbr.rel (0) target = $region13
  $region12: #{decoder_forward.4} parent=0 // pred_region
    _
  $region13: #{decoder_forward.4} parent=0 // pred_fallthru
    _
  // Predicated region
  $region14: #{decoder_forward.4} parent=0 // pred_check
    _
  $region15: #{decoder_forward.4} parent=0 // pred_check_branch
    %20 = sbr.rel (0) target = $region17
  $region16: #{decoder_forward.4} parent=0 // pred_region
    _
  $region17: #{decoder_forward.4} parent=0 // pred_fallthru
    _
  // Predicated region
  $region18: #{decoder_forward.4} parent=0 // pred_check
    _
  $region19: #{decoder_forward.4} parent=0 // pred_check_branch
    %22 = sbr.rel (0) target = $region21
  $region20: #{decoder_forward.4} parent=0 // pred_region
    _
  $region21: #{decoder_forward.4} parent=0 // pred_fallthru
    _
  %p23 = scmp.eq.s32.totalorder 0, 0
  // Predicated region
  $region22: #{decoder_forward.4} parent=0 // pred_check
    %p24 = pneg %p23
  $region23: #{decoder_forward.4} parent=0 // pred_check_branch
    %26 = sbr.rel (%p24) target = $region25
  $region24: #{decoder_forward.4} parent=0 // pred_region
    %v27 = vld [vmem:[%s3] sm:$0xff]
    %vm28 = vcmask 261120
    %29 = vst.msk [vmem:[#allocation2] sm:$0xff] %vm28, %v27
    %v30 = vld [vmem:[%s4] sm:$0xff]
    %31 = vst.msk [vmem:[#allocation3] sm:$0xff] %vm28, %v30
  $region25: #{decoder_forward.4} parent=0 // pred_fallthru
    _
  %v32 = vld [vmem:[%s1] sm:$0xff]
  %v33 = vld [vmem:[%s1 + $0x8] sm:$0xff]
  %v34 = vld [vmem:[%s1 + $0x10] sm:$0xff]
  %v35 = vld [vmem:[%s1 + $0x18] sm:$0xff]
  %v36 = vld [vmem:[%s2] sm:$0xff]
  %s37 = smul.u32 0, 8
  %v38 = vld [vmem:[#allocation2] sm:$0xff]
  %v39 = vld [vmem:[#allocation3] sm:$0xff]
  %v40 = vld [vmem:[%s0] sm:$0xff]
  %vm41 = vcmask 261120
  %v43 = vsel %vm41, %v38, 0
  %45 = vmatpush.msra.mxu0 0.0
  %46 = vmatpush.msra.mxu0 0.0
  %47 = vmatpush.msra.mxu0 0.0
  %48 = vmatpush.msra.mxu0 0.0
  %49 = vmatpush.msra.mxu0 0.0
  %50 = vmatpush.msra.mxu0 0.0
  %51 = vmatpush.msra.mxu0 0.0
  %52 = vmatpush.msra.mxu0 0.0
  %53 = vmatpush.msra.mxu0 0.0
  %54 = vmatpush.msra.mxu0 0.0
  %55 = vmatpush.msra.mxu0 0.0
  %56 = vmatpush.msra.mxu0 0.0
  %57 = vmatpush.msra.mxu0 %v35
  %58 = vmatpush.msra.mxu0 %v34
  %59 = vmatpush.msra.mxu0 %v33
  %60 = vmatpush.msra.mxu0 %v32
  %61 = vmatmul.f32.gmra.mxu0 %v43
  %v62 = vpop.f32.mrf.mxu0
  %v63 = vadd.f32 0.0, %v62
  %64 = vdwg.mxu0
  %v65 = vadd.f32 %v40, %v63
  %v66 = vxor.u32 %v65, 2147483648
  %v67 = vmul.f32 %v66, 1.442695
  %v68 = vpow.pop %v67
  %v69 = vadd.f32 %v68, 1.0
  %v70 = vrcp.pop %v69
  %v71 = vmul.f32 %v69, %v70
  %v72 = vsub.f32 1.0, %v71
  %v73 = vmul.f32 %v70, %v72
  %v74 = vadd.f32 %v70, %v73
  %vm75 = vweird.f32 %v69
  %vm76 = vweird.f32 %v70
  %vm77 = vmor %vm75, %vm76
  %v78 = vsel %vm77, %v70, %v74
  %v79 = vand.u32 2147483647, %v69
  %vm80 = vcmp.eq.f32.partialorder %v79, 8.507059e+37
  %v81 = vand.u32 %v69, 2147483648
  %v82 = vor.u32 1.1754944e-38, %v81
  %v83 = vsel %vm80, %v82, %v78
  %v84 = vmul.f32 1.0, %v83
  %v85 = vtanh.pop %v65
  %87 = vrot.lane.b32.xlu0 %v39, 32
  %v88 = vpop.permute.xlu0 %87
  %v90 = vmul.f32 %v84, %v88
  %92 = vrot.lane.b32.xlu0 %v85, 64
  %v93 = vpop.permute.xlu0 %92
  %v95 = vmul.f32 %v84, %v93
  %97 = vrot.lane.b32.xlu0 %v95, 32
  %v98 = vpop.permute.xlu0 %97
  %v100 = vadd.f32 %v90, %v98
  %v101 = vtanh.pop %v100
  %103 = vrot.lane.b32.xlu0 %v101, 64
  %v104 = vpop.permute.xlu0 %103
  %v106 = vmul.f32 %v84, %v104
  %v107 = vstv %s37
  %vm108 = vcmp.lt.s32.totalorder %v107, %v36
  %v109 = vsel %vm108, 1, 0
  %110 = vset.pattern.permute.xlu0 0
  %111 = vperm.xlu0 %110, %v109
  %v112 = vpop.permute.xlu0 %111
  %vm113 = vcmp.eq.s32.totalorder %v112, 1
  %114 = vrot.lane.b32.xlu0 %v38, 96
  %v115 = vpop.permute.xlu0 %114
  %v117 = vsel %vm113, %v106, %v115
  %119 = vrot.lane.b32.xlu0 %v117, 32
  %v120 = vpop.permute.xlu0 %119
  %122 = vst.msk [vmem:[#allocation2] sm:$0xff] %vm41, %v120
  %v123 = vsel %vm113, %v100, %v88
  %125 = vrot.lane.b32.xlu0 %v123, 96
  %v126 = vpop.permute.xlu0 %125
  %128 = vst.msk [vmem:[#allocation3] sm:$0xff] %vm41, %v126
  %v129 = vsel %vm113, %v106, 0.0
  %131 = vrot.lane.b32.xlu0 %v129, 32
  %v132 = vpop.permute.xlu0 %131
  %134 = vst.msk [vmem:[%s5] sm:$0xff] %vm41, %v132
  %s135 = sadd.s32 %s37, 1
  %v136 = vld [vmem:[#allocation2] sm:$0xff]
  %v137 = vld [vmem:[#allocation3] sm:$0xff]
  %s138 = scalar_lea.vmem %s0, 8
  %v139 = vld [vmem:[%s138] sm:$0xff]
  %v141 = vsel %vm41, %v136, 0
  %143 = vmatpush.msra.mxu0 0.0
  %144 = vmatpush.msra.mxu0 0.0
  %145 = vmatpush.msra.mxu0 0.0
  %146 = vmatpush.msra.mxu0 0.0
  %147 = vmatpush.msra.mxu0 0.0
  %148 = vmatpush.msra.mxu0 0.0
  %149 = vmatpush.msra.mxu0 0.0
  %150 = vmatpush.msra.mxu0 0.0
  %151 = vmatpush.msra.mxu0 0.0
  %152 = vmatpush.msra.mxu0 0.0
  %153 = vmatpush.msra.mxu0 0.0
  %154 = vmatpush.msra.mxu0 0.0
  %155 = vmatpush.msra.mxu0 %v35
  %156 = vmatpush.msra.mxu0 %v34
  %157 = vmatpush.msra.mxu0 %v33
  %158 = vmatpush.msra.mxu0 %v32
  %159 = vmatmul.f32.gmra.mxu0 %v141
  %v160 = vpop.f32.mrf.mxu0
  %v161 = vadd.f32 0.0, %v160
  %162 = vdwg.mxu0
  %v163 = vadd.f32 %v139, %v161
  %v164 = vxor.u32 %v163, 2147483648
  %v165 = vmul.f32 %v164, 1.442695
  %v166 = vpow.pop %v165
  %v167 = vadd.f32 %v166, 1.0
  %v168 = vrcp.pop %v167
  %v169 = vmul.f32 %v167, %v168
  %v170 = vsub.f32 1.0, %v169
  %v171 = vmul.f32 %v168, %v170
  %v172 = vadd.f32 %v168, %v171
  %vm173 = vweird.f32 %v167
  %vm174 = vweird.f32 %v168
  %vm175 = vmor %vm173, %vm174
  %v176 = vsel %vm175, %v168, %v172
  %v177 = vand.u32 2147483647, %v167
  %vm178 = vcmp.eq.f32.partialorder %v177, 8.507059e+37
  %v179 = vand.u32 %v167, 2147483648
  %v180 = vor.u32 1.1754944e-38, %v179
  %v181 = vsel %vm178, %v180, %v176
  %v182 = vmul.f32 1.0, %v181
  %v183 = vtanh.pop %v163
  %185 = vrot.lane.b32.xlu0 %v137, 32
  %v186 = vpop.permute.xlu0 %185
  %v188 = vmul.f32 %v182, %v186
  %190 = vrot.lane.b32.xlu0 %v183, 64
  %v191 = vpop.permute.xlu0 %190
  %v193 = vmul.f32 %v182, %v191
  %195 = vrot.lane.b32.xlu0 %v193, 32
  %v196 = vpop.permute.xlu0 %195
  %v198 = vadd.f32 %v188, %v196
  %v199 = vtanh.pop %v198
  %201 = vrot.lane.b32.xlu0 %v199, 64
  %v202 = vpop.permute.xlu0 %201
  %v204 = vmul.f32 %v182, %v202
  %v205 = vstv %s135
  %vm206 = vcmp.lt.s32.totalorder %v205, %v36
  %v207 = vsel %vm206, 1, 0
  %208 = vset.pattern.permute.xlu0 0
  %209 = vperm.xlu0 %208, %v207
  %v210 = vpop.permute.xlu0 %209
  %vm211 = vcmp.eq.s32.totalorder %v210, 1
  %212 = vrot.lane.b32.xlu0 %v136, 96
  %v213 = vpop.permute.xlu0 %212
  %v215 = vsel %vm211, %v204, %v213
  %217 = vrot.lane.b32.xlu0 %v215, 32
  %v218 = vpop.permute.xlu0 %217
  %220 = vst.msk [vmem:[#allocation2] sm:$0xff] %vm41, %v218
  %v221 = vsel %vm211, %v198, %v186
  %223 = vrot.lane.b32.xlu0 %v221, 96
  %v224 = vpop.permute.xlu0 %223
  %226 = vst.msk [vmem:[#allocation3] sm:$0xff] %vm41, %v224
  %v227 = vsel %vm211, %v204, 0.0
  %229 = vrot.lane.b32.xlu0 %v227, 32
  %v230 = vpop.permute.xlu0 %229
  %s232 = scalar_lea.vmem %s5, 8
  %233 = vst.msk [vmem:[%s232] sm:$0xff] %vm41, %v230
  %s234 = sadd.s32 %s37, 2
  %v235 = vld [vmem:[#allocation2] sm:$0xff]
  %v236 = vld [vmem:[#allocation3] sm:$0xff]
  %s237 = scalar_lea.vmem %s0, 16
  %v238 = vld [vmem:[%s237] sm:$0xff]
  %v240 = vsel %vm41, %v235, 0
  %242 = vmatpush.msra.mxu0 0.0
  %243 = vmatpush.msra.mxu0 0.0
  %244 = vmatpush.msra.mxu0 0.0
  %245 = vmatpush.msra.mxu0 0.0
  %246 = vmatpush.msra.mxu0 0.0
  %247 = vmatpush.msra.mxu0 0.0
  %248 = vmatpush.msra.mxu0 0.0
  %249 = vmatpush.msra.mxu0 0.0
  %250 = vmatpush.msra.mxu0 0.0
  %251 = vmatpush.msra.mxu0 0.0
  %252 = vmatpush.msra.mxu0 0.0
  %253 = vmatpush.msra.mxu0 0.0
  %254 = vmatpush.msra.mxu0 %v35
  %255 = vmatpush.msra.mxu0 %v34
  %256 = vmatpush.msra.mxu0 %v33
  %257 = vmatpush.msra.mxu0 %v32
  %258 = vmatmul.f32.gmra.mxu0 %v240
  %v259 = vpop.f32.mrf.mxu0
  %v260 = vadd.f32 0.0, %v259
  %261 = vdwg.mxu0
  %v262 = vadd.f32 %v238, %v260
  %v263 = vxor.u32 %v262, 2147483648
  %v264 = vmul.f32 %v263, 1.442695
  %v265 = vpow.pop %v264
  %v266 = vadd.f32 %v265, 1.0
  %v267 = vrcp.pop %v266
  %v268 = vmul.f32 %v266, %v267
  %v269 = vsub.f32 1.0, %v268
  %v270 = vmul.f32 %v267, %v269
  %v271 = vadd.f32 %v267, %v270
  %vm272 = vweird.f32 %v266
  %vm273 = vweird.f32 %v267
  %vm274 = vmor %vm272, %vm273
  %v275 = vsel %vm274, %v267, %v271
  %v276 = vand.u32 2147483647, %v266
  %vm277 = vcmp.eq.f32.partialorder %v276, 8.507059e+37
  %v278 = vand.u32 %v266, 2147483648
  %v279 = vor.u32 1.1754944e-38, %v278
  %v280 = vsel %vm277, %v279, %v275
  %v281 = vmul.f32 1.0, %v280
  %v282 = vtanh.pop %v262
  %284 = vrot.lane.b32.xlu0 %v236, 32
  %v285 = vpop.permute.xlu0 %284
  %v287 = vmul.f32 %v281, %v285
  %289 = vrot.lane.b32.xlu0 %v282, 64
  %v290 = vpop.permute.xlu0 %289
  %v292 = vmul.f32 %v281, %v290
  %294 = vrot.lane.b32.xlu0 %v292, 32
  %v295 = vpop.permute.xlu0 %294
  %v297 = vadd.f32 %v287, %v295
  %v298 = vtanh.pop %v297
  %300 = vrot.lane.b32.xlu0 %v298, 64
  %v301 = vpop.permute.xlu0 %300
  %v303 = vmul.f32 %v281, %v301
  %v304 = vstv %s234
  %vm305 = vcmp.lt.s32.totalorder %v304, %v36
  %v306 = vsel %vm305, 1, 0
  %307 = vset.pattern.permute.xlu0 0
  %308 = vperm.xlu0 %307, %v306
  %v309 = vpop.permute.xlu0 %308
  %vm310 = vcmp.eq.s32.totalorder %v309, 1
  %311 = vrot.lane.b32.xlu0 %v235, 96
  %v312 = vpop.permute.xlu0 %311
  %v314 = vsel %vm310, %v303, %v312
  %316 = vrot.lane.b32.xlu0 %v314, 32
  %v317 = vpop.permute.xlu0 %316
  %319 = vst.msk [vmem:[#allocation2] sm:$0xff] %vm41, %v317
  %v320 = vsel %vm310, %v297, %v285
  %322 = vrot.lane.b32.xlu0 %v320, 96
  %v323 = vpop.permute.xlu0 %322
  %325 = vst.msk [vmem:[#allocation3] sm:$0xff] %vm41, %v323
  %v326 = vsel %vm310, %v303, 0.0
  %328 = vrot.lane.b32.xlu0 %v326, 32
  %v329 = vpop.permute.xlu0 %328
  %s331 = scalar_lea.vmem %s5, 16
  %332 = vst.msk [vmem:[%s331] sm:$0xff] %vm41, %v329
  %s333 = sadd.s32 %s37, 3
  %v334 = vld [vmem:[#allocation2] sm:$0xff]
  %v335 = vld [vmem:[#allocation3] sm:$0xff]
  %s336 = scalar_lea.vmem %s0, 24
  %v337 = vld [vmem:[%s336] sm:$0xff]
  %v339 = vsel %vm41, %v334, 0
  %341 = vmatpush.msra.mxu0 0.0
  %342 = vmatpush.msra.mxu0 0.0
  %343 = vmatpush.msra.mxu0 0.0
  %344 = vmatpush.msra.mxu0 0.0
  %345 = vmatpush.msra.mxu0 0.0
  %346 = vmatpush.msra.mxu0 0.0
  %347 = vmatpush.msra.mxu0 0.0
  %348 = vmatpush.msra.mxu0 0.0
  %349 = vmatpush.msra.mxu0 0.0
  %350 = vmatpush.msra.mxu0 0.0
  %351 = vmatpush.msra.mxu0 0.0
  %352 = vmatpush.msra.mxu0 0.0
  %353 = vmatpush.msra.mxu0 %v35
  %354 = vmatpush.msra.mxu0 %v34
  %355 = vmatpush.msra.mxu0 %v33
  %356 = vmatpush.msra.mxu0 %v32
  %357 = vmatmul.f32.gmra.mxu0 %v339
  %v358 = vpop.f32.mrf.mxu0
  %v359 = vadd.f32 0.0, %v358
  %360 = vdwg.mxu0
  %v361 = vadd.f32 %v337, %v359
  %v362 = vxor.u32 %v361, 2147483648
  %v363 = vmul.f32 %v362, 1.442695
  %v364 = vpow.pop %v363
  %v365 = vadd.f32 %v364, 1.0
  %v366 = vrcp.pop %v365
  %v367 = vmul.f32 %v365, %v366
  %v368 = vsub.f32 1.0, %v367
  %v369 = vmul.f32 %v366, %v368
  %v370 = vadd.f32 %v366, %v369
  %vm371 = vweird.f32 %v365
  %vm372 = vweird.f32 %v366
  %vm373 = vmor %vm371, %vm372
  %v374 = vsel %vm373, %v366, %v370
  %v375 = vand.u32 2147483647, %v365
  %vm376 = vcmp.eq.f32.partialorder %v375, 8.507059e+37
  %v377 = vand.u32 %v365, 2147483648
  %v378 = vor.u32 1.1754944e-38, %v377
  %v379 = vsel %vm376, %v378, %v374
  %v380 = vmul.f32 1.0, %v379
  %v381 = vtanh.pop %v361
  %383 = vrot.lane.b32.xlu0 %v335, 32
  %v384 = vpop.permute.xlu0 %383
  %v386 = vmul.f32 %v380, %v384
  %388 = vrot.lane.b32.xlu0 %v381, 64
  %v389 = vpop.permute.xlu0 %388
  %v391 = vmul.f32 %v380, %v389
  %393 = vrot.lane.b32.xlu0 %v391, 32
  %v394 = vpop.permute.xlu0 %393
  %v396 = vadd.f32 %v386, %v394
  %v397 = vtanh.pop %v396
  %399 = vrot.lane.b32.xlu0 %v397, 64
  %v400 = vpop.permute.xlu0 %399
  %v402 = vmul.f32 %v380, %v400
  %v403 = vstv %s333
  %vm404 = vcmp.lt.s32.totalorder %v403, %v36
  %v405 = vsel %vm404, 1, 0
  %406 = vset.pattern.permute.xlu0 0
  %407 = vperm.xlu0 %406, %v405
  %v408 = vpop.permute.xlu0 %407
  %vm409 = vcmp.eq.s32.totalorder %v408, 1
  %410 = vrot.lane.b32.xlu0 %v334, 96
  %v411 = vpop.permute.xlu0 %410
  %v413 = vsel %vm409, %v402, %v411
  %415 = vrot.lane.b32.xlu0 %v413, 32
  %v416 = vpop.permute.xlu0 %415
  %418 = vst.msk [vmem:[#allocation2] sm:$0xff] %vm41, %v416
  %v419 = vsel %vm409, %v396, %v384
  %421 = vrot.lane.b32.xlu0 %v419, 96
  %v422 = vpop.permute.xlu0 %421
  %424 = vst.msk [vmem:[#allocation3] sm:$0xff] %vm41, %v422
  %v425 = vsel %vm409, %v402, 0.0
  %427 = vrot.lane.b32.xlu0 %v425, 32
  %v428 = vpop.permute.xlu0 %427
  %s430 = scalar_lea.vmem %s5, 24
  %431 = vst.msk [vmem:[%s430] sm:$0xff] %vm41, %v428
  %s432 = sadd.s32 %s37, 4
  %v433 = vld [vmem:[#allocation2] sm:$0xff]
  %v434 = vld [vmem:[#allocation3] sm:$0xff]
  %s435 = scalar_lea.vmem %s0, 32
  %v436 = vld [vmem:[%s435] sm:$0xff]
  %v438 = vsel %vm41, %v433, 0
  %440 = vmatpush.msra.mxu0 0.0
  %441 = vmatpush.msra.mxu0 0.0
  %442 = vmatpush.msra.mxu0 0.0
  %443 = vmatpush.msra.mxu0 0.0
  %444 = vmatpush.msra.mxu0 0.0
  %445 = vmatpush.msra.mxu0 0.0
  %446 = vmatpush.msra.mxu0 0.0
  %447 = vmatpush.msra.mxu0 0.0
  %448 = vmatpush.msra.mxu0 0.0
  %449 = vmatpush.msra.mxu0 0.0
  %450 = vmatpush.msra.mxu0 0.0
  %451 = vmatpush.msra.mxu0 0.0
  %452 = vmatpush.msra.mxu0 %v35
  %453 = vmatpush.msra.mxu0 %v34
  %454 = vmatpush.msra.mxu0 %v33
  %455 = vmatpush.msra.mxu0 %v32
  %456 = vmatmul.f32.gmra.mxu0 %v438
  %v457 = vpop.f32.mrf.mxu0
  %v458 = vadd.f32 0.0, %v457
  %459 = vdwg.mxu0
  %v460 = vadd.f32 %v436, %v458
  %v461 = vxor.u32 %v460, 2147483648
  %v462 = vmul.f32 %v461, 1.442695
  %v463 = vpow.pop %v462
  %v464 = vadd.f32 %v463, 1.0
  %v465 = vrcp.pop %v464
  %v466 = vmul.f32 %v464, %v465
  %v467 = vsub.f32 1.0, %v466
  %v468 = vmul.f32 %v465, %v467
  %v469 = vadd.f32 %v465, %v468
  %vm470 = vweird.f32 %v464
  %vm471 = vweird.f32 %v465
  %vm472 = vmor %vm470, %vm471
  %v473 = vsel %vm472, %v465, %v469
  %v474 = vand.u32 2147483647, %v464
  %vm475 = vcmp.eq.f32.partialorder %v474, 8.507059e+37
  %v476 = vand.u32 %v464, 2147483648
  %v477 = vor.u32 1.1754944e-38, %v476
  %v478 = vsel %vm475, %v477, %v473
  %v479 = vmul.f32 1.0, %v478
  %v480 = vtanh.pop %v460
  %482 = vrot.lane.b32.xlu0 %v434, 32
  %v483 = vpop.permute.xlu0 %482
  %v485 = vmul.f32 %v479, %v483
  %487 = vrot.lane.b32.xlu0 %v480, 64
  %v488 = vpop.permute.xlu0 %487
  %v490 = vmul.f32 %v479, %v488
  %492 = vrot.lane.b32.xlu0 %v490, 32
  %v493 = vpop.permute.xlu0 %492
  %v495 = vadd.f32 %v485, %v493
  %v496 = vtanh.pop %v495
  %498 = vrot.lane.b32.xlu0 %v496, 64
  %v499 = vpop.permute.xlu0 %498
  %v501 = vmul.f32 %v479, %v499
  %v502 = vstv %s432
  %vm503 = vcmp.lt.s32.totalorder %v502, %v36
  %v504 = vsel %vm503, 1, 0
  %505 = vset.pattern.permute.xlu0 0
  %506 = vperm.xlu0 %505, %v504
  %v507 = vpop.permute.xlu0 %506
  %vm508 = vcmp.eq.s32.totalorder %v507, 1
  %509 = vrot.lane.b32.xlu0 %v433, 96
  %v510 = vpop.permute.xlu0 %509
  %v512 = vsel %vm508, %v501, %v510
  %514 = vrot.lane.b32.xlu0 %v512, 32
  %v515 = vpop.permute.xlu0 %514
  %517 = vst.msk [vmem:[#allocation2] sm:$0xff] %vm41, %v515
  %v518 = vsel %vm508, %v495, %v483
  %520 = vrot.lane.b32.xlu0 %v518, 96
  %v521 = vpop.permute.xlu0 %520
  %523 = vst.msk [vmem:[#allocation3] sm:$0xff] %vm41, %v521
  %v524 = vsel %vm508, %v501, 0.0
  %526 = vrot.lane.b32.xlu0 %v524, 32
  %v527 = vpop.permute.xlu0 %526
  %s529 = scalar_lea.vmem %s5, 32
  %530 = vst.msk [vmem:[%s529] sm:$0xff] %vm41, %v527
  %s531 = sadd.s32 %s37, 5
  %v532 = vld [vmem:[#allocation2] sm:$0xff]
  %v533 = vld [vmem:[#allocation3] sm:$0xff]
  %s534 = scalar_lea.vmem %s0, 40
  %v535 = vld [vmem:[%s534] sm:$0xff]
  %v537 = vsel %vm41, %v532, 0
  %539 = vmatpush.msra.mxu0 0.0
  %540 = vmatpush.msra.mxu0 0.0
  %541 = vmatpush.msra.mxu0 0.0
  %542 = vmatpush.msra.mxu0 0.0
  %543 = vmatpush.msra.mxu0 0.0
  %544 = vmatpush.msra.mxu0 0.0
  %545 = vmatpush.msra.mxu0 0.0
  %546 = vmatpush.msra.mxu0 0.0
  %547 = vmatpush.msra.mxu0 0.0
  %548 = vmatpush.msra.mxu0 0.0
  %549 = vmatpush.msra.mxu0 0.0
  %550 = vmatpush.msra.mxu0 0.0
  %551 = vmatpush.msra.mxu0 %v35
  %552 = vmatpush.msra.mxu0 %v34
  %553 = vmatpush.msra.mxu0 %v33
  %554 = vmatpush.msra.mxu0 %v32
  %555 = vmatmul.f32.gmra.mxu0 %v537
  %v556 = vpop.f32.mrf.mxu0
  %v557 = vadd.f32 0.0, %v556
  %558 = vdwg.mxu0
  %v559 = vadd.f32 %v535, %v557
  %v560 = vxor.u32 %v559, 2147483648
  %v561 = vmul.f32 %v560, 1.442695
  %v562 = vpow.pop %v561
  %v563 = vadd.f32 %v562, 1.0
  %v564 = vrcp.pop %v563
  %v565 = vmul.f32 %v563, %v564
  %v566 = vsub.f32 1.0, %v565
  %v567 = vmul.f32 %v564, %v566
  %v568 = vadd.f32 %v564, %v567
  %vm569 = vweird.f32 %v563
  %vm570 = vweird.f32 %v564
  %vm571 = vmor %vm569, %vm570
  %v572 = vsel %vm571, %v564, %v568
  %v573 = vand.u32 2147483647, %v563
  %vm574 = vcmp.eq.f32.partialorder %v573, 8.507059e+37
  %v575 = vand.u32 %v563, 2147483648
  %v576 = vor.u32 1.1754944e-38, %v575
  %v577 = vsel %vm574, %v576, %v572
  %v578 = vmul.f32 1.0, %v577
  %v579 = vtanh.pop %v559
  %581 = vrot.lane.b32.xlu0 %v533, 32
  %v582 = vpop.permute.xlu0 %581
  %v584 = vmul.f32 %v578, %v582
  %586 = vrot.lane.b32.xlu0 %v579, 64
  %v587 = vpop.permute.xlu0 %586
  %v589 = vmul.f32 %v578, %v587
  %591 = vrot.lane.b32.xlu0 %v589, 32
  %v592 = vpop.permute.xlu0 %591
  %v594 = vadd.f32 %v584, %v592
  %v595 = vtanh.pop %v594
  %597 = vrot.lane.b32.xlu0 %v595, 64
  %v598 = vpop.permute.xlu0 %597
  %v600 = vmul.f32 %v578, %v598
  %v601 = vstv %s531
  %vm602 = vcmp.lt.s32.totalorder %v601, %v36
  %v603 = vsel %vm602, 1, 0
  %604 = vset.pattern.permute.xlu0 0
  %605 = vperm.xlu0 %604, %v603
  %v606 = vpop.permute.xlu0 %605
  %vm607 = vcmp.eq.s32.totalorder %v606, 1
  %608 = vrot.lane.b32.xlu0 %v532, 96
  %v609 = vpop.permute.xlu0 %608
  %v611 = vsel %vm607, %v600, %v609
  %613 = vrot.lane.b32.xlu0 %v611, 32
  %v614 = vpop.permute.xlu0 %613
  %616 = vst.msk [vmem:[#allocation2] sm:$0xff] %vm41, %v614
  %v617 = vsel %vm607, %v594, %v582
  %619 = vrot.lane.b32.xlu0 %v617, 96
  %v620 = vpop.permute.xlu0 %619
  %622 = vst.msk [vmem:[#allocation3] sm:$0xff] %vm41, %v620
  %v623 = vsel %vm607, %v600, 0.0
  %625 = vrot.lane.b32.xlu0 %v623, 32
  %v626 = vpop.permute.xlu0 %625
  %s628 = scalar_lea.vmem %s5, 40
  %629 = vst.msk [vmem:[%s628] sm:$0xff] %vm41, %v626
  %s630 = sadd.s32 %s37, 6
  %v631 = vld [vmem:[#allocation2] sm:$0xff]
  %v632 = vld [vmem:[#allocation3] sm:$0xff]
  %s633 = scalar_lea.vmem %s0, 48
  %v634 = vld [vmem:[%s633] sm:$0xff]
  %v636 = vsel %vm41, %v631, 0
  %638 = vmatpush.msra.mxu0 0.0
  %639 = vmatpush.msra.mxu0 0.0
  %640 = vmatpush.msra.mxu0 0.0
  %641 = vmatpush.msra.mxu0 0.0
  %642 = vmatpush.msra.mxu0 0.0
  %643 = vmatpush.msra.mxu0 0.0
  %644 = vmatpush.msra.mxu0 0.0
  %645 = vmatpush.msra.mxu0 0.0
  %646 = vmatpush.msra.mxu0 0.0
  %647 = vmatpush.msra.mxu0 0.0
  %648 = vmatpush.msra.mxu0 0.0
  %649 = vmatpush.msra.mxu0 0.0
  %650 = vmatpush.msra.mxu0 %v35
  %651 = vmatpush.msra.mxu0 %v34
  %652 = vmatpush.msra.mxu0 %v33
  %653 = vmatpush.msra.mxu0 %v32
  %654 = vmatmul.f32.gmra.mxu0 %v636
  %v655 = vpop.f32.mrf.mxu0
  %v656 = vadd.f32 0.0, %v655
  %657 = vdwg.mxu0
  %v658 = vadd.f32 %v634, %v656
  %v659 = vxor.u32 %v658, 2147483648
  %v660 = vmul.f32 %v659, 1.442695
  %v661 = vpow.pop %v660
  %v662 = vadd.f32 %v661, 1.0
  %v663 = vrcp.pop %v662
  %v664 = vmul.f32 %v662, %v663
  %v665 = vsub.f32 1.0, %v664
  %v666 = vmul.f32 %v663, %v665
  %v667 = vadd.f32 %v663, %v666
  %vm668 = vweird.f32 %v662
  %vm669 = vweird.f32 %v663
  %vm670 = vmor %vm668, %vm669
  %v671 = vsel %vm670, %v663, %v667
  %v672 = vand.u32 2147483647, %v662
  %vm673 = vcmp.eq.f32.partialorder %v672, 8.507059e+37
  %v674 = vand.u32 %v662, 2147483648
  %v675 = vor.u32 1.1754944e-38, %v674
  %v676 = vsel %vm673, %v675, %v671
  %v677 = vmul.f32 1.0, %v676
  %v678 = vtanh.pop %v658
  %680 = vrot.lane.b32.xlu0 %v632, 32
  %v681 = vpop.permute.xlu0 %680
  %v683 = vmul.f32 %v677, %v681
  %685 = vrot.lane.b32.xlu0 %v678, 64
  %v686 = vpop.permute.xlu0 %685
  %v688 = vmul.f32 %v677, %v686
  %690 = vrot.lane.b32.xlu0 %v688, 32
  %v691 = vpop.permute.xlu0 %690
  %v693 = vadd.f32 %v683, %v691
  %v694 = vtanh.pop %v693
  %696 = vrot.lane.b32.xlu0 %v694, 64
  %v697 = vpop.permute.xlu0 %696
  %v699 = vmul.f32 %v677, %v697
  %v700 = vstv %s630
  %vm701 = vcmp.lt.s32.totalorder %v700, %v36
  %v702 = vsel %vm701, 1, 0
  %703 = vset.pattern.permute.xlu0 0
  %704 = vperm.xlu0 %703, %v702
  %v705 = vpop.permute.xlu0 %704
  %vm706 = vcmp.eq.s32.totalorder %v705, 1
  %707 = vrot.lane.b32.xlu0 %v631, 96
  %v708 = vpop.permute.xlu0 %707
  %v710 = vsel %vm706, %v699, %v708
  %712 = vrot.lane.b32.xlu0 %v710, 32
  %v713 = vpop.permute.xlu0 %712
  %715 = vst.msk [vmem:[#allocation2] sm:$0xff] %vm41, %v713
  %v716 = vsel %vm706, %v693, %v681
  %718 = vrot.lane.b32.xlu0 %v716, 96
  %v719 = vpop.permute.xlu0 %718
  %721 = vst.msk [vmem:[#allocation3] sm:$0xff] %vm41, %v719
  %v722 = vsel %vm706, %v699, 0.0
  %724 = vrot.lane.b32.xlu0 %v722, 32
  %v725 = vpop.permute.xlu0 %724
  %s727 = scalar_lea.vmem %s5, 48
  %728 = vst.msk [vmem:[%s727] sm:$0xff] %vm41, %v725
  %s729 = sadd.s32 %s37, 7
  %v730 = vld [vmem:[#allocation2] sm:$0xff]
  %v731 = vld [vmem:[#allocation3] sm:$0xff]
  %s732 = scalar_lea.vmem %s0, 56
  %v733 = vld [vmem:[%s732] sm:$0xff]
  %v735 = vsel %vm41, %v730, 0
  %737 = vmatpush.msra.mxu0 0.0
  %738 = vmatpush.msra.mxu0 0.0
  %739 = vmatpush.msra.mxu0 0.0
  %740 = vmatpush.msra.mxu0 0.0
  %741 = vmatpush.msra.mxu0 0.0
  %742 = vmatpush.msra.mxu0 0.0
  %743 = vmatpush.msra.mxu0 0.0
  %744 = vmatpush.msra.mxu0 0.0
  %745 = vmatpush.msra.mxu0 0.0
  %746 = vmatpush.msra.mxu0 0.0
  %747 = vmatpush.msra.mxu0 0.0
  %748 = vmatpush.msra.mxu0 0.0
  %749 = vmatpush.msra.mxu0 %v35
  %750 = vmatpush.msra.mxu0 %v34
  %751 = vmatpush.msra.mxu0 %v33
  %752 = vmatpush.msra.mxu0 %v32
  %753 = vmatmul.f32.gmra.mxu0 %v735
  %v754 = vpop.f32.mrf.mxu0
  %v755 = vadd.f32 0.0, %v754
  %756 = vdwg.mxu0
  %v757 = vadd.f32 %v733, %v755
  %v758 = vxor.u32 %v757, 2147483648
  %v759 = vmul.f32 %v758, 1.442695
  %v760 = vpow.pop %v759
  %v761 = vadd.f32 %v760, 1.0
  %v762 = vrcp.pop %v761
  %v763 = vmul.f32 %v761, %v762
  %v764 = vsub.f32 1.0, %v763
  %v765 = vmul.f32 %v762, %v764
  %v766 = vadd.f32 %v762, %v765
  %vm767 = vweird.f32 %v761
  %vm768 = vweird.f32 %v762
  %vm769 = vmor %vm767, %vm768
  %v770 = vsel %vm769, %v762, %v766
  %v771 = vand.u32 2147483647, %v761
  %vm772 = vcmp.eq.f32.partialorder %v771, 8.507059e+37
  %v773 = vand.u32 %v761, 2147483648
  %v774 = vor.u32 1.1754944e-38, %v773
  %v775 = vsel %vm772, %v774, %v770
  %v776 = vmul.f32 1.0, %v775
  %v777 = vtanh.pop %v757
  %779 = vrot.lane.b32.xlu0 %v731, 32
  %v780 = vpop.permute.xlu0 %779
  %v782 = vmul.f32 %v776, %v780
  %784 = vrot.lane.b32.xlu0 %v777, 64
  %v785 = vpop.permute.xlu0 %784
  %v787 = vmul.f32 %v776, %v785
  %789 = vrot.lane.b32.xlu0 %v787, 32
  %v790 = vpop.permute.xlu0 %789
  %v792 = vadd.f32 %v782, %v790
  %v793 = vtanh.pop %v792
  %795 = vrot.lane.b32.xlu0 %v793, 64
  %v796 = vpop.permute.xlu0 %795
  %v798 = vmul.f32 %v776, %v796
  %v799 = vstv %s729
  %vm800 = vcmp.lt.s32.totalorder %v799, %v36
  %v801 = vsel %vm800, 1, 0
  %802 = vset.pattern.permute.xlu0 0
  %803 = vperm.xlu0 %802, %v801
  %v804 = vpop.permute.xlu0 %803
  %vm805 = vcmp.eq.s32.totalorder %v804, 1
  %806 = vrot.lane.b32.xlu0 %v730, 96
  %v807 = vpop.permute.xlu0 %806
  %v809 = vsel %vm805, %v798, %v807
  %811 = vrot.lane.b32.xlu0 %v809, 32
  %v812 = vpop.permute.xlu0 %811
  %814 = vst.msk [vmem:[#allocation2] sm:$0xff] %vm41, %v812
  %v815 = vsel %vm805, %v792, %v780
  %817 = vrot.lane.b32.xlu0 %v815, 96
  %v818 = vpop.permute.xlu0 %817
  %820 = vst.msk [vmem:[#allocation3] sm:$0xff] %vm41, %v818
  %v821 = vsel %vm805, %v798, 0.0
  %823 = vrot.lane.b32.xlu0 %v821, 32
  %v824 = vpop.permute.xlu0 %823
  %s826 = scalar_lea.vmem %s5, 56
  %827 = vst.msk [vmem:[%s826] sm:$0xff] %vm41, %v824
  // Predicated region
  $region26: #{decoder_forward.4} parent=0 // pred_check
    %p828 = pneg %p23
  $region27: #{decoder_forward.4} parent=0 // pred_check_branch
    %830 = sbr.rel (%p828) target = $region29
  $region28: #{decoder_forward.4} parent=0 // pred_region
    %v831 = vld [vmem:[#allocation2] sm:$0xff]
    %832 = vst.msk [vmem:[%s6] sm:$0xff] %vm41, %v831
    %v833 = vld [vmem:[#allocation3] sm:$0xff]
    %834 = vst.msk [vmem:[%s7] sm:$0xff] %vm41, %v833
  $region29: #{decoder_forward.4} parent=0 // pred_fallthru
    _
  // Predicated region
  $region30: #{decoder_forward.4} parent=0 // pred_check
    _
  $region31: #{decoder_forward.4} parent=0 // pred_check_branch
    %836 = sbr.rel (0) target = $region33
  $region32: #{decoder_forward.4} parent=0 // pred_region
    _
  $region33: #{decoder_forward.4} parent=0 // pred_fallthru
    _
  // Predicated region
  $region34: #{decoder_forward.4} parent=0 // pred_check
    _
  $region35: #{decoder_forward.4} parent=0 // pred_check_branch
    %838 = sbr.rel (0) target = $region37
  $region36: #{decoder_forward.4} parent=0 // pred_region
    _
  $region37: #{decoder_forward.4} parent=0 // pred_fallthru
    _
  // Predicated region
  $region38: #{decoder_forward.4} parent=0 // pred_check
    _
  $region39: #{decoder_forward.4} parent=0 // pred_check_branch
    %840 = sbr.rel (0) target = $region41
  $region40: #{decoder_forward.4} parent=0 // pred_region
    _
  $region41: #{decoder_forward.4} parent=0 // pred_fallthru
    _
  // Predicated region
  $region42: #{decoder_forward.4} parent=0 // pred_check
    _
  $region43: #{decoder_forward.4} parent=0 // pred_check_branch
    %842 = sbr.rel (0) target = $region45
  $region44: #{decoder_forward.4} parent=0 // pred_region
    _
  $region45: #{decoder_forward.4} parent=0 // pred_fallthru
    _
  // Predicated region
  $region46: #{decoder_forward.4} parent=0 // pred_check
    _
  $region47: #{decoder_forward.4} parent=0 // pred_check_branch
    %844 = sbr.rel (0) target = $region49
  $region48: #{decoder_forward.4} parent=0 // pred_region
    _
  $region49: #{decoder_forward.4} parent=0 // pred_fallthru
    _
  // Predicated region
  $region50: #{decoder_forward.4} parent=0 // pred_check
    _
  $region51: #{decoder_forward.4} parent=0 // pred_check_branch
    %846 = sbr.rel (0) target = $region53
  $region52: #{decoder_forward.4} parent=0 // pred_region
    _
  $region53: #{decoder_forward.4} parent=0 // pred_fallthru
    _

</llo_original>
